<compile_context>
chip_gen: v6e
topology: v6e:2x2x1
jax: 0.10.0
libtpu: 0.0.40
codegen_flags: <defaults>
</compile_context>

<pallas_src>
import math

import jax
import jax.numpy as jnp
from jax import lax
from jax.experimental import pallas as pl
from jax.experimental.pallas import tpu as pltpu  # noqa: F401  (TPU backend)

# ---- model dims (small, consistent with MiniKLConfig semantics) ----
B, S, D = 2, 16, 64
BS = B * S               # batch folded into rows -> 32
H = 8                    # num_heads (== g)
DH = D // H              # d_head = 8
DFF = 2 * 4 * D // 3     # GLU hidden = 170
DFP = 256                # GLU hidden zero-padded to a clean 128-multiple
THETA = 1.0e6
EPS = 1.1920928955078125e-07   # torch.finfo(torch.float32).eps
NEG = -1e30                    # additive mask value (avoid inf-inf NaN risk)


def minikl_block_kernel(x_ref, n1_ref, n2_ref,
                        wqv_ref, bqv_ref, wo_ref, bo_ref,
                        wab_ref, bab_ref, wd_ref, bd_ref,
                        cos_ref, sin_ref, hmask_ref, amask_ref, o_ref):
    x = x_ref[...]                                   # (BS, D) f32

    def rmsnorm(v, w):
        ms = jnp.mean(v * v, axis=-1, keepdims=True)
        return v * lax.rsqrt(ms + EPS) * w

    # ---- attention branch ----
    h = rmsnorm(x, n1_ref[...])

    # single merged projection: [wq*s | (wq*s)@rot | wv]  (s = d_head**-0.25 scale fold)
    # weights are bf16 in HBM; cast the activation and accumulate in f32.
    qv = jnp.dot(h.astype(jnp.bfloat16), wqv_ref[...],
                 preferred_element_type=jnp.float32) + bqv_ref[...]
    u_q = qv[:, :D]
    u_r = qv[:, D:2 * D]          # == u_q @ rot (folded into the weight host-side)
    v = qv[:, 2 * D:3 * D]

    # RoPE is pure VALU: q = rope(u_q), k = rope(rope(u_q)) via angle doubling.
    cos = cos_ref[...]
    sin = sin_ref[...]
    cos2 = cos * cos - sin * sin
    sin2 = 2.0 * sin * cos
    q = u_q * cos + u_r * sin
    k = u_q * cos2 + u_r * sin2

    # Block-diagonal Q over heads via the precomputed 0/1 head mask (one vmul, no iota/select).
    hmask = hmask_ref[...]                                       # (H*BS, D) 0/1 f32
    q_bd = jnp.concatenate([q] * H, axis=0) * hmask              # (H*BS, D)

    # All heads' scores in ONE matmul: (H*BS, D) x (BS, D)^T -> (H*BS, BS), keys along lanes.
    s = lax.dot_general(q_bd, k, (((1,), (1,)), ((), ())),
                        preferred_element_type=jnp.float32)      # (256, 32)

    # precomputed additive block-causal mask (0 where valid, -1e30 otherwise), tiled over heads
    s = s + amask_ref[...]

    # ONE softmax pass over all heads (lane-axis reductions; diagonal always unmasked).
    m = jnp.max(s, axis=-1, keepdims=True)
    p = jnp.exp(s - m)
    denom = jnp.sum(p, axis=-1, keepdims=True)
    p = p * pl.reciprocal(denom, approx=True)                    # (256, 32)

    # ONE PV matmul for all heads, head-masked, then sum the 8 row blocks -> (BS, D)
    pv = jnp.dot(p, v, preferred_element_type=jnp.float32) * hmask   # (H*BS, D)
    attn = pv[0:BS, :]
    for hh in range(1, H):
        attn = attn + pv[hh * BS:(hh + 1) * BS, :]

    attn = jnp.dot(attn.astype(jnp.bfloat16), wo_ref[...],
                   preferred_element_type=jnp.float32) + bo_ref[...]

    x1 = x + attn

    # ---- GLU branch (wa/wb merged, each zero-padded to 256 lanes) ----
    h2 = rmsnorm(x1, n2_ref[...])
    ab = jnp.dot(h2.astype(jnp.bfloat16), wab_ref[...],
                 preferred_element_type=jnp.float32) + bab_ref[...]
    a = ab[:, :DFP]
    bgate = ab[:, DFP:]
    up = a * (bgate * jax.nn.sigmoid(bgate))         # padded lanes are exactly zero
    down = jnp.dot(up.astype(jnp.bfloat16), wd_ref[...],
                   preferred_element_type=jnp.float32) + bd_ref[...]

    o_ref[...] = x1 + down


def minikl_block(x, fused):
    (n1, n2, wqv, bqv, wo, bo, wab, bab, wd_p, bd, cos_f, sin_f, hmask, amask) = fused
    x2 = x.reshape(BS, D)
    out = pl.pallas_call(
        minikl_block_kernel,
        out_shape=jax.ShapeDtypeStruct((BS, D), jnp.float32),
        # gridless: single invocation, every (tiny, <0.5 MB total) operand resident in VMEM.
        # TODO(synk): for real B*S >> 32, add a leading row-slab grid axis with
        # dimension_semantics=("parallel",) so both v7x TensorCores are used.
    )(x2, n1, n2, wqv, bqv, wo, bo, wab, bab, wd_p, bd, cos_f, sin_f, hmask, amask)
    return out.reshape(B, S, D)


# ---- RoPE tables / rotation matrix (precomputed like the PyTorch buffers) ----
def make_rope_tables():
    pos = jnp.arange(S, dtype=jnp.float32)[:, None]
    i = jnp.arange(DH // 2, dtype=jnp.float32)
    omega = jnp.exp(-2.0 * i / DH * math.log(THETA))
    ang = pos * omega                                      # (S, DH//2)
    sin = jnp.repeat(jnp.sin(ang), 2, axis=-1)             # repeat_interleave(2, -1)
    cos = jnp.repeat(jnp.cos(ang), 2, axis=-1)
    # tile per head: heads are contiguous along D, d_head is even so parity aligns
    return jnp.tile(cos, (1, H)), jnp.tile(sin, (1, H))    # (S, D) each


def make_rot_matrix():
    # (x @ R)[2i] = x[2i+1] ; (x @ R)[2i+1] = -x[2i]
    r = jnp.zeros((D, D), jnp.float32)
    idx = jnp.arange(0, D, 2)
    r = r.at[idx + 1, idx].set(1.0)
    r = r.at[idx, idx + 1].set(-1.0)
    return r


# ---- host-side weight fusion / mask precompute for the kernel ----
def fuse_params(params):
    (n1, n2, wq, bq, wv, bv, wo, bo, wa, ba, wb, bb, wd, bd, cos, sin, rot) = params

    # Fold d_head**-0.25 into wq so q and k (derived from q) each carry one factor,
    # yielding exactly the 1/sqrt(d_head) score scale.
    s4 = float(DH) ** -0.25
    wq_s, bq_s = wq * s4, bq * s4
    wqr, bqr = wq_s @ rot, bq_s @ rot
    wqv = jnp.concatenate([wq_s, wqr, wv], axis=1).astype(jnp.bfloat16)   # (D, 3D) bf16
    bqv = jnp.concatenate([bq_s, bqr, bv], axis=1)                        # (1, 3D) f32

    # Folded-batch RoPE tables (double-angle tables are recomputed in-kernel).
    cos_f = jnp.tile(cos, (B, 1))                           # (B*S, D)
    sin_f = jnp.tile(sin, (B, 1))

    # GLU: merge wa/wb, zero-pad DFF(170) -> DFP(256) so up/down matmuls hit clean 128-multiples.
    wa_p = jnp.zeros((D, DFP), jnp.float32).at[:, :DFF].set(wa)
    wb_p = jnp.zeros((D, DFP), jnp.float32).at[:, :DFF].set(wb)
    ba_p = jnp.zeros((1, DFP), jnp.float32).at[:, :DFF].set(ba)
    bb_p = jnp.zeros((1, DFP), jnp.float32).at[:, :DFF].set(bb)
    wab = jnp.concatenate([wa_p, wb_p], axis=1).astype(jnp.bfloat16)      # (D, 2*DFP) bf16
    bab = jnp.concatenate([ba_p, bb_p], axis=1)                           # (1, 2*DFP) f32
    wd_p = jnp.zeros((DFP, D), jnp.float32).at[:DFF, :].set(wd).astype(jnp.bfloat16)

    wo_b = wo.astype(jnp.bfloat16)

    # Precomputed masks (move all iota/compare/select work off the TensorCore):
    # 1) block-diagonal 0/1 head mask: row block h keeps only feature lanes of head h.
    rows = jnp.arange(H * BS)
    hmask = (rows[:, None] // BS == (jnp.arange(D)[None, :] // DH)).astype(jnp.float32)
    # 2) additive block-causal mask (batch folded into rows: same-batch AND causal), tiled
    #    identically over head row-blocks; 0 where valid, -1e30 otherwise.
    rq = rows % BS
    ck = jnp.arange(BS)
    valid = (ck[None, :] <= rq[:, None]) & ((rq[:, None] // S) == (ck[None, :] // S))
    amask = jnp.where(valid, 0.0, NEG).astype(jnp.float32)

    return (n1, n2, wqv, bqv, wo_b, bo, wab, bab, wd_p, bd, cos_f, sin_f, hmask, amask)


# ---- pure-JAX reference (mirrors the PyTorch forward semantics, unfused f32 weights) ----
def reference(x, params):
    (n1, n2, wq, bq, wv, bv, wo, bo, wa, ba, wb, bb, wd, bd, cos, sin, rot) = params

    def rmsnorm(v, w):
        return v * lax.rsqrt(jnp.mean(v * v, -1, keepdims=True) + EPS) * w

    def rope(t):
        return t * cos + (t @ rot) * sin

    h = rmsnorm(x, n1)
    q = h @ wq + bq
    v = h @ wv + bv
    q = rope(q)
    k = rope(q)                                   # rope applied twice to q, as in the reference
    qh = q.reshape(B, S, H, DH).transpose(0, 2, 1, 3)
    kh = k.reshape(B, S, H, DH).transpose(0, 2, 1, 3)
    vh = v.reshape(B, S, H, DH).transpose(0, 2, 1, 3)
    s = jnp.einsum('bhqd,bhkd->bhqk', qh, kh) / math.sqrt(DH)
    mask = jnp.tril(jnp.ones((S, S), bool))
    s = jnp.where(mask, s, -jnp.inf)
    p = jax.nn.softmax(s, axis=-1)
    o = jnp.einsum('bhqk,bhkd->bhqd', p, vh).transpose(0, 2, 1, 3).reshape(B, S, D)
    x1 = x + (o @ wo + bo)
    h2 = rmsnorm(x1, n2)
    a = h2 @ wa + ba
    bgl = h2 @ wb + bb
    up = a * (jax.nn.sigmoid(bgl) * bgl)
    return x1 + (up @ wd + bd)


if __name__ == "__main__":
    key = jax.random.PRNGKey(0)
    ks = jax.random.split(key, 14)

    def w(k, shape, scale=0.05):
        return jax.random.normal(k, shape, jnp.float32) * scale

    n1 = jnp.ones((1, D), jnp.float32)         # RMSNorm weights init to ones
    n2 = jnp.ones((1, D), jnp.float32)
    wq, bq = w(ks[0], (D, D)), w(ks[1], (1, D))
    wv, bv = w(ks[2], (D, D)), w(ks[3], (1, D))
    wo, bo = w(ks[4], (D, D)), w(ks[5], (1, D))
    wa, ba = w(ks[6], (D, DFF)), w(ks[7], (1, DFF))
    wb, bb = w(ks[8], (D, DFF)), w(ks[9], (1, DFF))
    wd, bd = w(ks[10], (DFF, D)), w(ks[11], (1, D))
    cos, sin = make_rope_tables()
    rot = make_rot_matrix()
    params = (n1, n2, wq, bq, wv, bv, wo, bo, wa, ba, wb, bb, wd, bd, cos, sin, rot)

    x = jax.random.normal(ks[12], (B, S, D), jnp.float32)

    fused = fuse_params(params)
    out = jax.block_until_ready(minikl_block(x, fused))
    ref = reference(x, params)
    assert out.shape == (B, S, D)
    err = float(jnp.max(jnp.abs(out - ref)))
    if err > 1e-2:
        raise AssertionError(f"kernel mismatch vs reference: max abs err = {err}")
    print("KERNEL_OK")
</pallas_src>

<mosaic_0001>
module attributes {stable_mosaic.version = 11 : i64} {
  func.func @minikl_block_kernel(%arg0: memref<32x64xf32, #tpu.memory_space<vmem>>, %arg1: memref<1x64xf32, #tpu.memory_space<vmem>>, %arg2: memref<1x64xf32, #tpu.memory_space<vmem>>, %arg3: memref<64x192xbf16, #tpu.memory_space<vmem>>, %arg4: memref<1x192xf32, #tpu.memory_space<vmem>>, %arg5: memref<64x64xbf16, #tpu.memory_space<vmem>>, %arg6: memref<1x64xf32, #tpu.memory_space<vmem>>, %arg7: memref<64x512xbf16, #tpu.memory_space<vmem>>, %arg8: memref<1x512xf32, #tpu.memory_space<vmem>>, %arg9: memref<256x64xbf16, #tpu.memory_space<vmem>>, %arg10: memref<1x64xf32, #tpu.memory_space<vmem>>, %arg11: memref<32x64xf32, #tpu.memory_space<vmem>>, %arg12: memref<32x64xf32, #tpu.memory_space<vmem>>, %arg13: memref<256x64xf32, #tpu.memory_space<vmem>>, %arg14: memref<256x32xf32, #tpu.memory_space<vmem>>, %arg15: memref<32x64xf32, #tpu.memory_space<vmem>>) attributes {dimension_semantics = [], scalar_prefetch = 0 : i64, scratch_operands = 0 : i64, tpu.core_type = #tpu.core_type<tc>} {
    %c0 = arith.constant 0 : index
    %c0_0 = arith.constant 0 : index
    %0 = vector.load %arg0[%c0, %c0_0] : memref<32x64xf32, #tpu.memory_space<vmem>>, vector<32x64xf32>
    %c0_1 = arith.constant 0 : index
    %c0_2 = arith.constant 0 : index
    %1 = vector.load %arg1[%c0_1, %c0_2] : memref<1x64xf32, #tpu.memory_space<vmem>>, vector<1x64xf32>
    %2 = arith.mulf %0, %0 : vector<32x64xf32>
    %cst = arith.constant dense<0.000000e+00> : vector<32xf32>
    %3 = vector.multi_reduction <add>, %2, %cst [1] : vector<32x64xf32> to vector<32xf32>
    %4 = vector.shape_cast %3 : vector<32xf32> to vector<32x1xf32>
    %cst_3 = arith.constant 6.400000e+01 : f32
    %5 = vector.broadcast %cst_3 : f32 to vector<32x1xf32>
    %6 = arith.divf %4, %5 : vector<32x1xf32>
    %cst_4 = arith.constant 1.1920929E-7 : f32
    %7 = vector.broadcast %cst_4 : f32 to vector<32x1xf32>
    %8 = arith.addf %6, %7 : vector<32x1xf32>
    %9 = math.rsqrt %8 : vector<32x1xf32>
    %10 = vector.broadcast %9 : vector<32x1xf32> to vector<32x64xf32>
    %11 = arith.mulf %0, %10 : vector<32x64xf32>
    %12 = vector.broadcast %1 : vector<1x64xf32> to vector<32x64xf32>
    %13 = arith.mulf %11, %12 : vector<32x64xf32>
    %14 = arith.truncf %13 : vector<32x64xf32> to vector<32x64xbf16>
    %c0_5 = arith.constant 0 : index
    %c0_6 = arith.constant 0 : index
    %15 = vector.load %arg3[%c0_5, %c0_6] : memref<64x192xbf16, #tpu.memory_space<vmem>>, vector<64x192xbf16>
    %cst_7 = arith.constant dense<0.000000e+00> : vector<32x192xf32>
    %16 = tpu.matmul %14, %15, %cst_7 {dimension_numbers = #tpu.dot_dimension_numbers<[1], [0], [0], [1], [0, 0, 1, 1], [], []>} : vector<32x64xbf16>, vector<64x192xbf16>, vector<32x192xf32> -> vector<32x192xf32>
    %c0_8 = arith.constant 0 : index
    %c0_9 = arith.constant 0 : index
    %17 = vector.load %arg4[%c0_8, %c0_9] : memref<1x192xf32, #tpu.memory_space<vmem>>, vector<1x192xf32>
    %18 = vector.broadcast %17 : vector<1x192xf32> to vector<32x192xf32>
    %19 = arith.addf %16, %18 : vector<32x192xf32>
    %20 = vector.extract_strided_slice %19 {offsets = [0, 0], sizes = [32, 64], strides = [1, 1]} : vector<32x192xf32> to vector<32x64xf32>
    %21 = vector.extract_strided_slice %19 {offsets = [0, 64], sizes = [32, 64], strides = [1, 1]} : vector<32x192xf32> to vector<32x64xf32>
    %22 = vector.extract_strided_slice %19 {offsets = [0, 128], sizes = [32, 64], strides = [1, 1]} : vector<32x192xf32> to vector<32x64xf32>
    %c0_10 = arith.constant 0 : index
    %c0_11 = arith.constant 0 : index
    %23 = vector.load %arg11[%c0_10, %c0_11] : memref<32x64xf32, #tpu.memory_space<vmem>>, vector<32x64xf32>
    %c0_12 = arith.constant 0 : index
    %c0_13 = arith.constant 0 : index
    %24 = vector.load %arg12[%c0_12, %c0_13] : memref<32x64xf32, #tpu.memory_space<vmem>>, vector<32x64xf32>
    %25 = arith.mulf %23, %23 : vector<32x64xf32>
    %26 = arith.mulf %24, %24 : vector<32x64xf32>
    %27 = arith.subf %25, %26 : vector<32x64xf32>
    %cst_14 = arith.constant 2.000000e+00 : f32
    %28 = vector.broadcast %cst_14 : f32 to vector<32x64xf32>
    %29 = arith.mulf %28, %24 : vector<32x64xf32>
    %30 = arith.mulf %29, %23 : vector<32x64xf32>
    %31 = arith.mulf %20, %23 : vector<32x64xf32>
    %32 = arith.mulf %21, %24 : vector<32x64xf32>
    %33 = arith.addf %31, %32 : vector<32x64xf32>
    %34 = arith.mulf %20, %27 : vector<32x64xf32>
    %35 = arith.mulf %21, %30 : vector<32x64xf32>
    %36 = arith.addf %34, %35 : vector<32x64xf32>
    %c0_15 = arith.constant 0 : index
    %c0_16 = arith.constant 0 : index
    %37 = vector.load %arg13[%c0_15, %c0_16] : memref<256x64xf32, #tpu.memory_space<vmem>>, vector<256x64xf32>
    %38 = tpu.concatenate %33, %33, %33, %33, %33, %33, %33, %33 in 0 : vector<32x64xf32>, vector<32x64xf32>, vector<32x64xf32>, vector<32x64xf32>, vector<32x64xf32>, vector<32x64xf32>, vector<32x64xf32>, vector<32x64xf32> -> vector<256x64xf32>
    %39 = arith.mulf %38, %37 : vector<256x64xf32>
    %cst_17 = arith.constant dense<0.000000e+00> : vector<256x32xf32>
    %40 = tpu.matmul %39, %36, %cst_17 {dimension_numbers = #tpu.dot_dimension_numbers<[1], [1], [0], [0], [0, 0, 1, 0], [], []>} : vector<256x64xf32>, vector<32x64xf32>, vector<256x32xf32> -> vector<256x32xf32>
    %c0_18 = arith.constant 0 : index
    %c0_19 = arith.constant 0 : index
    %41 = vector.load %arg14[%c0_18, %c0_19] : memref<256x32xf32, #tpu.memory_space<vmem>>, vector<256x32xf32>
    %42 = arith.addf %40, %41 : vector<256x32xf32>
    %cst_20 = arith.constant dense<0xFF800000> : vector<256xf32>
    %43 = vector.multi_reduction <maximumf>, %42, %cst_20 [1] : vector<256x32xf32> to vector<256xf32>
    %44 = vector.shape_cast %43 : vector<256xf32> to vector<256x1xf32>
    %45 = vector.broadcast %44 : vector<256x1xf32> to vector<256x32xf32>
    %46 = arith.subf %42, %45 : vector<256x32xf32>
    %47 = math.exp %46 : vector<256x32xf32>
    %cst_21 = arith.constant dense<0.000000e+00> : vector<256xf32>
    %48 = vector.multi_reduction <add>, %47, %cst_21 [1] : vector<256x32xf32> to vector<256xf32>
    %49 = vector.shape_cast %48 : vector<256xf32> to vector<256x1xf32>
    %50 = tpu.reciprocal %49 {approx = true} : vector<256x1xf32> -> vector<256x1xf32>
    %51 = vector.broadcast %50 : vector<256x1xf32> to vector<256x32xf32>
    %52 = arith.mulf %47, %51 : vector<256x32xf32>
    %cst_22 = arith.constant dense<0.000000e+00> : vector<256x64xf32>
    %53 = tpu.matmul %52, %22, %cst_22 {dimension_numbers = #tpu.dot_dimension_numbers<[1], [0], [0], [1], [0, 0, 1, 1], [], []>} : vector<256x32xf32>, vector<32x64xf32>, vector<256x64xf32> -> vector<256x64xf32>
    %54 = arith.mulf %53, %37 : vector<256x64xf32>
    %55 = vector.extract_strided_slice %54 {offsets = [0, 0], sizes = [32, 64], strides = [1, 1]} : vector<256x64xf32> to vector<32x64xf32>
    %56 = vector.extract_strided_slice %54 {offsets = [32, 0], sizes = [32, 64], strides = [1, 1]} : vector<256x64xf32> to vector<32x64xf32>
    %57 = arith.addf %55, %56 : vector<32x64xf32>
    %58 = vector.extract_strided_slice %54 {offsets = [64, 0], sizes = [32, 64], strides = [1, 1]} : vector<256x64xf32> to vector<32x64xf32>
    %59 = arith.addf %57, %58 : vector<32x64xf32>
    %60 = vector.extract_strided_slice %54 {offsets = [96, 0], sizes = [32, 64], strides = [1, 1]} : vector<256x64xf32> to vector<32x64xf32>
    %61 = arith.addf %59, %60 : vector<32x64xf32>
    %62 = vector.extract_strided_slice %54 {offsets = [128, 0], sizes = [32, 64], strides = [1, 1]} : vector<256x64xf32> to vector<32x64xf32>
    %63 = arith.addf %61, %62 : vector<32x64xf32>
    %64 = vector.extract_strided_slice %54 {offsets = [160, 0], sizes = [32, 64], strides = [1, 1]} : vector<256x64xf32> to vector<32x64xf32>
    %65 = arith.addf %63, %64 : vector<32x64xf32>
    %66 = vector.extract_strided_slice %54 {offsets = [192, 0], sizes = [32, 64], strides = [1, 1]} : vector<256x64xf32> to vector<32x64xf32>
    %67 = arith.addf %65, %66 : vector<32x64xf32>
    %68 = vector.extract_strided_slice %54 {offsets = [224, 0], sizes = [32, 64], strides = [1, 1]} : vector<256x64xf32> to vector<32x64xf32>
    %69 = arith.addf %67, %68 : vector<32x64xf32>
    %70 = arith.truncf %69 : vector<32x64xf32> to vector<32x64xbf16>
    %c0_23 = arith.constant 0 : index
    %c0_24 = arith.constant 0 : index
    %71 = vector.load %arg5[%c0_23, %c0_24] : memref<64x64xbf16, #tpu.memory_space<vmem>>, vector<64x64xbf16>
    %cst_25 = arith.constant dense<0.000000e+00> : vector<32x64xf32>
    %72 = tpu.matmul %70, %71, %cst_25 {dimension_numbers = #tpu.dot_dimension_numbers<[1], [0], [0], [1], [0, 0, 1, 1], [], []>} : vector<32x64xbf16>, vector<64x64xbf16>, vector<32x64xf32> -> vector<32x64xf32>
    %c0_26 = arith.constant 0 : index
    %c0_27 = arith.constant 0 : index
    %73 = vector.load %arg6[%c0_26, %c0_27] : memref<1x64xf32, #tpu.memory_space<vmem>>, vector<1x64xf32>
    %74 = vector.broadcast %73 : vector<1x64xf32> to vector<32x64xf32>
    %75 = arith.addf %72, %74 : vector<32x64xf32>
    %76 = arith.addf %0, %75 : vector<32x64xf32>
    %c0_28 = arith.constant 0 : index
    %c0_29 = arith.constant 0 : index
    %77 = vector.load %arg2[%c0_28, %c0_29] : memref<1x64xf32, #tpu.memory_space<vmem>>, vector<1x64xf32>
    %78 = arith.mulf %76, %76 : vector<32x64xf32>
    %cst_30 = arith.constant dense<0.000000e+00> : vector<32xf32>
    %79 = vector.multi_reduction <add>, %78, %cst_30 [1] : vector<32x64xf32> to vector<32xf32>
    %80 = vector.shape_cast %79 : vector<32xf32> to vector<32x1xf32>
    %cst_31 = arith.constant 6.400000e+01 : f32
    %81 = vector.broadcast %cst_31 : f32 to vector<32x1xf32>
    %82 = arith.divf %80, %81 : vector<32x1xf32>
    %cst_32 = arith.constant 1.1920929E-7 : f32
    %83 = vector.broadcast %cst_32 : f32 to vector<32x1xf32>
    %84 = arith.addf %82, %83 : vector<32x1xf32>
    %85 = math.rsqrt %84 : vector<32x1xf32>
    %86 = vector.broadcast %85 : vector<32x1xf32> to vector<32x64xf32>
    %87 = arith.mulf %76, %86 : vector<32x64xf32>
    %88 = vector.broadcast %77 : vector<1x64xf32> to vector<32x64xf32>
    %89 = arith.mulf %87, %88 : vector<32x64xf32>
    %90 = arith.truncf %89 : vector<32x64xf32> to vector<32x64xbf16>
    %c0_33 = arith.constant 0 : index
    %c0_34 = arith.constant 0 : index
    %91 = vector.load %arg7[%c0_33, %c0_34] : memref<64x512xbf16, #tpu.memory_space<vmem>>, vector<64x512xbf16>
    %cst_35 = arith.constant dense<0.000000e+00> : vector<32x512xf32>
    %92 = tpu.matmul %90, %91, %cst_35 {dimension_numbers = #tpu.dot_dimension_numbers<[1], [0], [0], [1], [0, 0, 1, 1], [], []>} : vector<32x64xbf16>, vector<64x512xbf16>, vector<32x512xf32> -> vector<32x512xf32>
    %c0_36 = arith.constant 0 : index
    %c0_37 = arith.constant 0 : index
    %93 = vector.load %arg8[%c0_36, %c0_37] : memref<1x512xf32, #tpu.memory_space<vmem>>, vector<1x512xf32>
    %94 = vector.broadcast %93 : vector<1x512xf32> to vector<32x512xf32>
    %95 = arith.addf %92, %94 : vector<32x512xf32>
    %96 = vector.extract_strided_slice %95 {offsets = [0, 0], sizes = [32, 256], strides = [1, 1]} : vector<32x512xf32> to vector<32x256xf32>
    %97 = vector.extract_strided_slice %95 {offsets = [0, 256], sizes = [32, 256], strides = [1, 1]} : vector<32x512xf32> to vector<32x256xf32>
    %98 = arith.negf %97 : vector<32x256xf32>
    %99 = math.exp %98 : vector<32x256xf32>
    %cst_38 = arith.constant 1.000000e+00 : f32
    %100 = vector.broadcast %cst_38 : f32 to vector<32x256xf32>
    %101 = arith.addf %100, %99 : vector<32x256xf32>
    %102 = arith.divf %100, %101 : vector<32x256xf32>
    %103 = arith.mulf %97, %102 : vector<32x256xf32>
    %104 = arith.mulf %96, %103 : vector<32x256xf32>
    %105 = arith.truncf %104 : vector<32x256xf32> to vector<32x256xbf16>
    %c0_39 = arith.constant 0 : index
    %c0_40 = arith.constant 0 : index
    %106 = vector.load %arg9[%c0_39, %c0_40] : memref<256x64xbf16, #tpu.memory_space<vmem>>, vector<256x64xbf16>
    %cst_41 = arith.constant dense<0.000000e+00> : vector<32x64xf32>
    %107 = tpu.matmul %105, %106, %cst_41 {dimension_numbers = #tpu.dot_dimension_numbers<[1], [0], [0], [1], [0, 0, 1, 1], [], []>} : vector<32x256xbf16>, vector<256x64xbf16>, vector<32x64xf32> -> vector<32x64xf32>
    %c0_42 = arith.constant 0 : index
    %c0_43 = arith.constant 0 : index
    %108 = vector.load %arg10[%c0_42, %c0_43] : memref<1x64xf32, #tpu.memory_space<vmem>>, vector<1x64xf32>
    %109 = vector.broadcast %108 : vector<1x64xf32> to vector<32x64xf32>
    %110 = arith.addf %107, %109 : vector<32x64xf32>
    %111 = arith.addf %76, %110 : vector<32x64xf32>
    %c0_44 = arith.constant 0 : index
    %c0_45 = arith.constant 0 : index
    %112 = vector.load %arg15[%c0_44, %c0_45] : memref<32x64xf32, #tpu.memory_space<vmem>>, vector<32x64xf32>
    tpu.vector_store %arg15[%c0_44, %c0_45], %111 {strides = array<i32>} : memref<32x64xf32, #tpu.memory_space<vmem>>, vector<32x64xf32>,
    return
  }
}

</mosaic_0001>

<llo_original>
// kernel: tpu_custom_call.1
$region0: #{tpu_custom_call.1}
  #allocation0 [shape = 'u32[]', space=smem, size = 0x4, offset = 0x4, fixed_abs, tag = 'smem constant byte address 0x4 - core index']
  #allocation1 [shape = 'u32[144,128]{1,0:T(1,128)}', space=vmem, size = 0x12000, scoped, tag = 'internal scratch']
  %s0 = inlined_call_operand.vmem [shape: f32[32,64], index: 0, kind: input, shape index: {}]
  %s1 = inlined_call_operand.vmem [shape: f32[1,64], index: 1, kind: input, shape index: {}]
  %s2 = inlined_call_operand.vmem [shape: f32[1,64], index: 2, kind: input, shape index: {}]
  %s3 = inlined_call_operand.vmem [shape: bf16[64,192], index: 3, kind: input, shape index: {}]
  %s4 = inlined_call_operand.vmem [shape: f32[1,192], index: 4, kind: input, shape index: {}]
  %s5 = inlined_call_operand.vmem [shape: bf16[64,64], index: 5, kind: input, shape index: {}]
  %s6 = inlined_call_operand.vmem [shape: f32[1,64], index: 6, kind: input, shape index: {}]
  %s7 = inlined_call_operand.vmem [shape: bf16[64,512], index: 7, kind: input, shape index: {}]
  %s8 = inlined_call_operand.vmem [shape: f32[1,512], index: 8, kind: input, shape index: {}]
  %s9 = inlined_call_operand.vmem [shape: bf16[256,64], index: 9, kind: input, shape index: {}]
  %s10 = inlined_call_operand.vmem [shape: f32[1,64], index: 10, kind: input, shape index: {}]
  %s11 = inlined_call_operand.vmem [shape: f32[32,64], index: 11, kind: input, shape index: {}]
  %s12 = inlined_call_operand.vmem [shape: f32[32,64], index: 12, kind: input, shape index: {}]
  %s13 = inlined_call_operand.vmem [shape: f32[256,64], index: 13, kind: input, shape index: {}]
  %s14 = inlined_call_operand.vmem [shape: f32[256,32], index: 14, kind: input, shape index: {}]
  %s15 = inlined_call_operand.hbm [shape: f32[32,64], index: 15, kind: output, shape index: {}]
  %s16 = sld [smem:[#allocation0]]
  $region70: #{tpu_custom_call.1} parent=0
    _
  %s18 = ssub.s32 1, %s16
  %s19 = scalar_select 0, %s18, %s16
  $region1: #{tpu_custom_call.1} parent=0
    #allocation2 [shape = 'u8[16384]{0}', space=vmem, size = 0x4000, scoped, tag = 'output window, operand 0, single buffered']
    #allocation3 [shape = 's32[1]{0}', space=sflag, size = 0x4, scoped, tag = 'scoped memory for tpu_custom_call.1']
    %20 = vsyncpa [#allocation3], 0
    // Predicated region
    $region2: #{tpu_custom_call.1} parent=1 // pred_check
      _
    $region3: #{tpu_custom_call.1} parent=1 // pred_check_branch
      %22 = sbr.rel (0) target = $region5
    $region4: #{tpu_custom_call.1} parent=1 // pred_region
      _
    $region5: #{tpu_custom_call.1} parent=1 // pred_fallthru
      _
    // Predicated region
    $region6: #{tpu_custom_call.1} parent=1 // pred_check
      _
    $region7: #{tpu_custom_call.1} parent=1 // pred_check_branch
      %24 = sbr.rel (0) target = $region9
    $region8: #{tpu_custom_call.1} parent=1 // pred_region
      _
    $region9: #{tpu_custom_call.1} parent=1 // pred_fallthru
      _
    // Predicated region
    $region10: #{tpu_custom_call.1} parent=1 // pred_check
      _
    $region11: #{tpu_custom_call.1} parent=1 // pred_check_branch
      %26 = sbr.rel (0) target = $region13
    $region12: #{tpu_custom_call.1} parent=1 // pred_region
      _
    $region13: #{tpu_custom_call.1} parent=1 // pred_fallthru
      _
    // Predicated region
    $region14: #{tpu_custom_call.1} parent=1 // pred_check
      _
    $region15: #{tpu_custom_call.1} parent=1 // pred_check_branch
      %28 = sbr.rel (0) target = $region17
    $region16: #{tpu_custom_call.1} parent=1 // pred_region
      _
    $region17: #{tpu_custom_call.1} parent=1 // pred_fallthru
      _
    // Predicated region
    $region18: #{tpu_custom_call.1} parent=1 // pred_check
      _
    $region19: #{tpu_custom_call.1} parent=1 // pred_check_branch
      %30 = sbr.rel (0) target = $region21
    $region20: #{tpu_custom_call.1} parent=1 // pred_region
      _
    $region21: #{tpu_custom_call.1} parent=1 // pred_fallthru
      _
    // Predicated region
    $region22: #{tpu_custom_call.1} parent=1 // pred_check
      _
    $region23: #{tpu_custom_call.1} parent=1 // pred_check_branch
      %32 = sbr.rel (0) target = $region25
    $region24: #{tpu_custom_call.1} parent=1 // pred_region
      _
    $region25: #{tpu_custom_call.1} parent=1 // pred_fallthru
      _
    // Predicated region
    $region26: #{tpu_custom_call.1} parent=1 // pred_check
      _
    $region27: #{tpu_custom_call.1} parent=1 // pred_check_branch
      %34 = sbr.rel (0) target = $region29
    $region28: #{tpu_custom_call.1} parent=1 // pred_region
      _
    $region29: #{tpu_custom_call.1} parent=1 // pred_fallthru
      _
    // Predicated region
    $region30: #{tpu_custom_call.1} parent=1 // pred_check
      _
    $region31: #{tpu_custom_call.1} parent=1 // pred_check_branch
      %36 = sbr.rel (0) target = $region33
    $region32: #{tpu_custom_call.1} parent=1 // pred_region
      _
    $region33: #{tpu_custom_call.1} parent=1 // pred_fallthru
      _
    // Predicated region
    $region34: #{tpu_custom_call.1} parent=1 // pred_check
      _
    $region35: #{tpu_custom_call.1} parent=1 // pred_check_branch
      %38 = sbr.rel (0) target = $region37
    $region36: #{tpu_custom_call.1} parent=1 // pred_region
      _
    $region37: #{tpu_custom_call.1} parent=1 // pred_fallthru
      _
    // Predicated region
    $region38: #{tpu_custom_call.1} parent=1 // pred_check
      _
    $region39: #{tpu_custom_call.1} parent=1 // pred_check_branch
      %40 = sbr.rel (0) target = $region41
    $region40: #{tpu_custom_call.1} parent=1 // pred_region
      _
    $region41: #{tpu_custom_call.1} parent=1 // pred_fallthru
      _
    // Predicated region
    $region42: #{tpu_custom_call.1} parent=1 // pred_check
      _
    $region43: #{tpu_custom_call.1} parent=1 // pred_check_branch
      %42 = sbr.rel (0) target = $region45
    $region44: #{tpu_custom_call.1} parent=1 // pred_region
      _
    $region45: #{tpu_custom_call.1} parent=1 // pred_fallthru
      _
    // Predicated region
    $region46: #{tpu_custom_call.1} parent=1 // pred_check
      _
    $region47: #{tpu_custom_call.1} parent=1 // pred_check_branch
      %44 = sbr.rel (0) target = $region49
    $region48: #{tpu_custom_call.1} parent=1 // pred_region
      _
    $region49: #{tpu_custom_call.1} parent=1 // pred_fallthru
      _
    // Predicated region
    $region50: #{tpu_custom_call.1} parent=1 // pred_check
      _
    $region51: #{tpu_custom_call.1} parent=1 // pred_check_branch
      %46 = sbr.rel (0) target = $region53
    $region52: #{tpu_custom_call.1} parent=1 // pred_region
      _
    $region53: #{tpu_custom_call.1} parent=1 // pred_fallthru
      _
    // Predicated region
    $region54: #{tpu_custom_call.1} parent=1 // pred_check
      _
    $region55: #{tpu_custom_call.1} parent=1 // pred_check_branch
      %48 = sbr.rel (0) target = $region57
    $region56: #{tpu_custom_call.1} parent=1 // pred_region
      _
    $region57: #{tpu_custom_call.1} parent=1 // pred_fallthru
      _
    // Predicated region
    $region58: #{tpu_custom_call.1} parent=1 // pred_check
      _
    $region59: #{tpu_custom_call.1} parent=1 // pred_check_branch
      %50 = sbr.rel (0) target = $region61
    $region60: #{tpu_custom_call.1} parent=1 // pred_region
      _
    $region61: #{tpu_custom_call.1} parent=1 // pred_fallthru
      _
    %v52 = vld [vmem:[%s0] sm:$0xff]
    %v53 = vld [vmem:[%s0 + $0x8] sm:$0xff]
    %v54 = vld [vmem:[%s0 + $0x10] sm:$0xff]
    %v55 = vld [vmem:[%s0 + $0x18] sm:$0xff]
    %v56 = vld [vmem:[%s1] sm:$0x1]
    %v57 = vmul.f32 %v52, %v52
    %v58 = vmul.f32 %v53, %v53
    %v59 = vmul.f32 %v54, %v54
    %v60 = vmul.f32 %v55, %v55
    %vm61 = vcmask 523264
    %v62 = vsel %vm61, %v57, 0.0
    %63 = vadd.xlane.f32.xlu0 %v62
    %v64 = vpop.xlane.xlu0 %63
    %v65 = vsel %vm61, %v58, 0.0
    %66 = vadd.xlane.f32.xlu0 %v65
    %v67 = vpop.xlane.xlu0 %66
    %v68 = vsel %vm61, %v59, 0.0
    %69 = vadd.xlane.f32.xlu0 %v68
    %v70 = vpop.xlane.xlu0 %69
    %v71 = vsel %vm61, %v60, 0.0
    %72 = vadd.xlane.f32.xlu0 %v71
    %v73 = vpop.xlane.xlu0 %72
    %v74 = vrcp.pop 64.0
    %v75 = vmul.f32 %v64, %v74
    %v76 = vmul.f32 %v67, %v74
    %v77 = vmul.f32 %v70, %v74
    %v78 = vmul.f32 %v73, %v74
    %v79 = vadd.f32 %v75, 1.1920929e-07
    %v80 = vadd.f32 %v76, 1.1920929e-07
    %v81 = vadd.f32 %v77, 1.1920929e-07
    %v82 = vadd.f32 %v78, 1.1920929e-07
    %v83 = vrsqrt.pop %v79
    %v84 = vrsqrt.pop %v80
    %v85 = vrsqrt.pop %v81
    %v86 = vrsqrt.pop %v82
    %v87 = vmul.f32 %v52, %v83
    %v88 = vmul.f32 %v53, %v84
    %v89 = vmul.f32 %v54, %v85
    %v90 = vmul.f32 %v55, %v86
    %v92 = vlaneseq
    %v93 = vshrl.u32 %v92, 7
    %v94 = vsub.s32 0, %v93
    %v95 = vrot.slane %v56, %v94
    %v97 = vmul.f32 %v87, %v95
    %v98 = vmul.f32 %v88, %v95
    %v99 = vmul.f32 %v89, %v95
    %v100 = vmul.f32 %v90, %v95
    %v101 = vpack.c.bf16 %v98, %v97
    %v102 = vpack.c.bf16 %v100, %v99
    %v103 = vld [vmem:[%s3] sm:$0xff]
    %v104 = vld [vmem:[%s3 + $0x8] sm:$0xff]
    %v105 = vld [vmem:[%s3 + $0x10] sm:$0xff]
    %v106 = vld [vmem:[%s3 + $0x18] sm:$0xff]
    %v107 = vld [vmem:[%s3 + $0x20] sm:$0xff]
    %v108 = vld [vmem:[%s3 + $0x28] sm:$0xff]
    %v109 = vld [vmem:[%s3 + $0x30] sm:$0xff]
    %v110 = vld [vmem:[%s3 + $0x38] sm:$0xff]
    %v111 = vld [vmem:[%s4] sm:$0x3]
    %v113 = vlaneseq
    %v114 = vshrl.u32 %v113, 7
    %v115 = vsub.s32 0, %v114
    %v116 = vrot.slane %v111, %v115
    %v117 = vlaneseq
    %v118 = vshrl.u32 %v117, 7
    %v119 = vsub.s32 1, %v118
    %v120 = vrot.slane %v111, %v119
    %v131 = vunpack.c.l.b16 %v103
    %v132 = vunpack.c.h.b16 %v103
    %v133 = vunpack.c.l.b16 %v104
    %v134 = vunpack.c.h.b16 %v104
    %v135 = vunpack.c.l.b16 %v105
    %v136 = vunpack.c.h.b16 %v105
    %v137 = vunpack.c.l.b16 %v106
    %v138 = vunpack.c.h.b16 %v106
    %v139 = vunpack.c.l.b16 %v107
    %v140 = vunpack.c.h.b16 %v107
    %v141 = vunpack.c.l.b16 %v108
    %v142 = vunpack.c.h.b16 %v108
    %v143 = vunpack.c.l.b16 %v109
    %v144 = vunpack.c.h.b16 %v109
    %v145 = vunpack.c.l.b16 %v110
    %v146 = vunpack.c.h.b16 %v110
    %v147 = vpack.c.b16 %v133, %v131
    %v148 = vpack.c.b16 %v134, %v132
    %v149 = vpack.c.b16 %v137, %v135
    %v150 = vpack.c.b16 %v138, %v136
    %v151 = vpack.c.b16 %v141, %v139
    %v152 = vpack.c.b16 %v142, %v140
    %v153 = vpack.c.b16 %v145, %v143
    %v154 = vpack.c.b16 %v146, %v144
    %v164 = vsel %vm61, %v101, 0
    %v167 = vsel %vm61, %v102, 0
    %169 = vmatprep.subr.bf16.mxu0 0
    %170 = vmatpush1.bf16.msra.mxu0 0
    %171 = vmatprep.subr.bf16.mxu0 0
    %172 = vmatpush1.bf16.msra.mxu0 0
    %173 = vmatprep.subr.bf16.mxu0 0
    %174 = vmatpush1.bf16.msra.mxu0 0
    %175 = vmatprep.subr.bf16.mxu0 0
    %176 = vmatpush1.bf16.msra.mxu0 0
    %177 = vmatprep.subr.bf16.mxu0 %v154
    %178 = vmatpush1.bf16.msra.mxu0 %v153
    %179 = vmatprep.subr.bf16.mxu0 %v152
    %180 = vmatpush1.bf16.msra.mxu0 %v151
    %181 = vmatprep.subr.bf16.mxu0 %v150
    %182 = vmatpush1.bf16.msra.mxu0 %v149
    %183 = vmatprep.subr.bf16.mxu0 %v148
    %184 = vmatpush1.bf16.msra.mxu0 %v147
    %185 = vmatprep.subr.bf16.mxu0 0
    %186 = vmatpush2.bf16.msra.mxu0 0
    %187 = vmatprep.subr.bf16.mxu0 0
    %188 = vmatpush2.bf16.msra.mxu0 0
    %189 = vmatprep.subr.bf16.mxu0 0
    %190 = vmatpush2.bf16.msra.mxu0 0
    %191 = vmatprep.subr.bf16.mxu0 0
    %192 = vmatpush2.bf16.msra.mxu0 0
    %193 = vmatprep.subr.bf16.mxu0 0
    %194 = vmatpush2.bf16.msra.mxu0 0
    %195 = vmatprep.subr.bf16.mxu0 0
    %196 = vmatpush2.bf16.msra.mxu0 0
    %197 = vmatprep.subr.bf16.mxu0 0
    %198 = vmatpush2.bf16.msra.mxu0 0
    %199 = vmatprep.subr.bf16.mxu0 0
    %200 = vmatpush2.bf16.msra.mxu0 0
    %201 = vmatprep.mubr.bf16.mxu0 0
    %202 = vmatmul.mubr.bf16.gmra.mxu0 %v164
    %v203 = vpop.f32.mrf.mxu0
    %v204 = vadd.f32 %v116, %v203
    %v205 = vpop.f32.mrf.mxu0
    %v206 = vadd.f32 %v120, %v205
    %v207 = vpop.f32.mrf.mxu0
    %v208 = vadd.f32 %v116, %v207
    %v209 = vpop.f32.mrf.mxu0
    %v210 = vadd.f32 %v120, %v209
    %211 = vmatprep.mubr.bf16.mxu0 0
    %212 = vmatmul.mubr.bf16.gmra.mxu0 %v167
    %v213 = vpop.f32.mrf.mxu0
    %v214 = vadd.f32 %v116, %v213
    %v215 = vpop.f32.mrf.mxu0
    %v216 = vadd.f32 %v120, %v215
    %v217 = vpop.f32.mrf.mxu0
    %v218 = vadd.f32 %v116, %v217
    %v219 = vpop.f32.mrf.mxu0
    %v220 = vadd.f32 %v120, %v219
    %221 = vdwg.mxu0
    %v222 = vld [vmem:[%s11] sm:$0xff]
    %v223 = vld [vmem:[%s11 + $0x8] sm:$0xff]
    %v224 = vld [vmem:[%s11 + $0x10] sm:$0xff]
    %v225 = vld [vmem:[%s11 + $0x18] sm:$0xff]
    %v226 = vld [vmem:[%s12] sm:$0xff]
    %v227 = vld [vmem:[%s12 + $0x8] sm:$0xff]
    %v228 = vld [vmem:[%s12 + $0x10] sm:$0xff]
    %v229 = vld [vmem:[%s12 + $0x18] sm:$0xff]
    %v230 = vmul.f32 %v222, %v222
    %v231 = vmul.f32 %v223, %v223
    %v232 = vmul.f32 %v224, %v224
    %v233 = vmul.f32 %v225, %v225
    %v234 = vmul.f32 %v226, %v226
    %v235 = vmul.f32 %v227, %v227
    %v236 = vmul.f32 %v228, %v228
    %v237 = vmul.f32 %v229, %v229
    %v238 = vsub.f32 %v230, %v234
    %v239 = vsub.f32 %v231, %v235
    %v240 = vsub.f32 %v232, %v236
    %v241 = vsub.f32 %v233, %v237
    %v242 = vmul.f32 %v226, 2.0
    %v243 = vmul.f32 %v227, 2.0
    %v244 = vmul.f32 %v228, 2.0
    %v245 = vmul.f32 %v229, 2.0
    %v246 = vmul.f32 %v242, %v222
    %v247 = vmul.f32 %v243, %v223
    %v248 = vmul.f32 %v244, %v224
    %v249 = vmul.f32 %v245, %v225
    %v250 = vmul.f32 %v204, %v222
    %v251 = vmul.f32 %v208, %v223
    %v252 = vmul.f32 %v214, %v224
    %v253 = vmul.f32 %v218, %v225
    %258 = vrot.lane.b32.xlu0 %v226, 64
    %v259 = vpop.permute.xlu0 %258
    %260 = vrot.lane.b32.xlu0 %v227, 64
    %v261 = vpop.permute.xlu0 %260
    %262 = vrot.lane.b32.xlu0 %v228, 64
    %v263 = vpop.permute.xlu0 %262
    %264 = vrot.lane.b32.xlu0 %v229, 64
    %v265 = vpop.permute.xlu0 %264
    %v270 = vmul.f32 %v204, %v259
    %v271 = vmul.f32 %v208, %v261
    %v272 = vmul.f32 %v214, %v263
    %v273 = vmul.f32 %v218, %v265
    %278 = vrot.lane.b32.xlu0 %v270, 64
    %v279 = vpop.permute.xlu0 %278
    %280 = vrot.lane.b32.xlu0 %v271, 64
    %v281 = vpop.permute.xlu0 %280
    %282 = vrot.lane.b32.xlu0 %v272, 64
    %v283 = vpop.permute.xlu0 %282
    %284 = vrot.lane.b32.xlu0 %v273, 64
    %v285 = vpop.permute.xlu0 %284
    %v290 = vadd.f32 %v250, %v279
    %v291 = vadd.f32 %v251, %v281
    %v292 = vadd.f32 %v252, %v283
    %v293 = vadd.f32 %v253, %v285
    %v294 = vmul.f32 %v204, %v238
    %v295 = vmul.f32 %v208, %v239
    %v296 = vmul.f32 %v214, %v240
    %v297 = vmul.f32 %v218, %v241
    %302 = vrot.lane.b32.xlu0 %v246, 64
    %v303 = vpop.permute.xlu0 %302
    %304 = vrot.lane.b32.xlu0 %v247, 64
    %v305 = vpop.permute.xlu0 %304
    %306 = vrot.lane.b32.xlu0 %v248, 64
    %v307 = vpop.permute.xlu0 %306
    %308 = vrot.lane.b32.xlu0 %v249, 64
    %v309 = vpop.permute.xlu0 %308
    %v314 = vmul.f32 %v204, %v303
    %v315 = vmul.f32 %v208, %v305
    %v316 = vmul.f32 %v214, %v307
    %v317 = vmul.f32 %v218, %v309
    %322 = vrot.lane.b32.xlu0 %v314, 64
    %v323 = vpop.permute.xlu0 %322
    %324 = vrot.lane.b32.xlu0 %v315, 64
    %v325 = vpop.permute.xlu0 %324
    %326 = vrot.lane.b32.xlu0 %v316, 64
    %v327 = vpop.permute.xlu0 %326
    %328 = vrot.lane.b32.xlu0 %v317, 64
    %v329 = vpop.permute.xlu0 %328
    %v334 = vadd.f32 %v294, %v323
    %v335 = vadd.f32 %v295, %v325
    %v336 = vadd.f32 %v296, %v327
    %v337 = vadd.f32 %v297, %v329
    %v338 = vld [vmem:[%s13] sm:$0xff]
    %v339 = vld [vmem:[%s13 + $0x8] sm:$0xff]
    %v340 = vld [vmem:[%s13 + $0x10] sm:$0xff]
    %v341 = vld [vmem:[%s13 + $0x18] sm:$0xff]
    %v342 = vld [vmem:[%s13 + $0x20] sm:$0xff]
    %v343 = vld [vmem:[%s13 + $0x28] sm:$0xff]
    %v344 = vld [vmem:[%s13 + $0x30] sm:$0xff]
    %v345 = vld [vmem:[%s13 + $0x38] sm:$0xff]
    %v346 = vld [vmem:[%s13 + $0x40] sm:$0xff]
    %v347 = vld [vmem:[%s13 + $0x48] sm:$0xff]
    %v348 = vld [vmem:[%s13 + $0x50] sm:$0xff]
    %v349 = vld [vmem:[%s13 + $0x58] sm:$0xff]
    %v350 = vld [vmem:[%s13 + $0x60] sm:$0xff]
    %v351 = vld [vmem:[%s13 + $0x68] sm:$0xff]
    %v352 = vld [vmem:[%s13 + $0x70] sm:$0xff]
    %v353 = vld [vmem:[%s13 + $0x78] sm:$0xff]
    %v354 = vld [vmem:[%s13 + $0x80] sm:$0xff]
    %v355 = vld [vmem:[%s13 + $0x88] sm:$0xff]
    %v356 = vld [vmem:[%s13 + $0x90] sm:$0xff]
    %v357 = vld [vmem:[%s13 + $0x98] sm:$0xff]
    %v358 = vld [vmem:[%s13 + $0xa0] sm:$0xff]
    %v359 = vld [vmem:[%s13 + $0xa8] sm:$0xff]
    %v360 = vld [vmem:[%s13 + $0xb0] sm:$0xff]
    %v361 = vld [vmem:[%s13 + $0xb8] sm:$0xff]
    %v362 = vld [vmem:[%s13 + $0xc0] sm:$0xff]
    %v363 = vld [vmem:[%s13 + $0xc8] sm:$0xff]
    %v364 = vld [vmem:[%s13 + $0xd0] sm:$0xff]
    %v365 = vld [vmem:[%s13 + $0xd8] sm:$0xff]
    %v366 = vld [vmem:[%s13 + $0xe0] sm:$0xff]
    %v367 = vld [vmem:[%s13 + $0xe8] sm:$0xff]
    %v368 = vld [vmem:[%s13 + $0xf0] sm:$0xff]
    %v369 = vld [vmem:[%s13 + $0xf8] sm:$0xff]
    %v370 = vmul.f32 %v290, %v338
    %v371 = vmul.f32 %v291, %v339
    %v372 = vmul.f32 %v292, %v340
    %v373 = vmul.f32 %v293, %v341
    %v374 = vmul.f32 %v290, %v342
    %v375 = vmul.f32 %v291, %v343
    %v376 = vmul.f32 %v292, %v344
    %v377 = vmul.f32 %v293, %v345
    %v378 = vmul.f32 %v290, %v346
    %v379 = vmul.f32 %v291, %v347
    %v380 = vmul.f32 %v292, %v348
    %v381 = vmul.f32 %v293, %v349
    %v382 = vmul.f32 %v290, %v350
    %v383 = vmul.f32 %v291, %v351
    %v384 = vmul.f32 %v292, %v352
    %v385 = vmul.f32 %v293, %v353
    %v386 = vmul.f32 %v290, %v354
    %v387 = vmul.f32 %v291, %v355
    %v388 = vmul.f32 %v292, %v356
    %v389 = vmul.f32 %v293, %v357
    %v390 = vmul.f32 %v290, %v358
    %v391 = vmul.f32 %v291, %v359
    %v392 = vmul.f32 %v292, %v360
    %v393 = vmul.f32 %v293, %v361
    %v394 = vmul.f32 %v290, %v362
    %v395 = vmul.f32 %v291, %v363
    %v396 = vmul.f32 %v292, %v364
    %v397 = vmul.f32 %v293, %v365
    %v398 = vmul.f32 %v290, %v366
    %v399 = vmul.f32 %v291, %v367
    %v400 = vmul.f32 %v292, %v368
    %v401 = vmul.f32 %v293, %v369
    %v402 = vld [vmem:[%s14] sm:$0xff]
    %v403 = vld [vmem:[%s14 + $0x8] sm:$0xff]
    %v404 = vld [vmem:[%s14 + $0x10] sm:$0xff]
    %v405 = vld [vmem:[%s14 + $0x18] sm:$0xff]
    %v406 = vld [vmem:[%s14 + $0x20] sm:$0xff]
    %v407 = vld [vmem:[%s14 + $0x28] sm:$0xff]
    %v408 = vld [vmem:[%s14 + $0x30] sm:$0xff]
    %v409 = vld [vmem:[%s14 + $0x38] sm:$0xff]
    %v410 = vld [vmem:[%s14 + $0x40] sm:$0xff]
    %v411 = vld [vmem:[%s14 + $0x48] sm:$0xff]
    %v412 = vld [vmem:[%s14 + $0x50] sm:$0xff]
    %v413 = vld [vmem:[%s14 + $0x58] sm:$0xff]
    %v414 = vld [vmem:[%s14 + $0x60] sm:$0xff]
    %v415 = vld [vmem:[%s14 + $0x68] sm:$0xff]
    %v416 = vld [vmem:[%s14 + $0x70] sm:$0xff]
    %v417 = vld [vmem:[%s14 + $0x78] sm:$0xff]
    %v418 = vld [vmem:[%s14 + $0x80] sm:$0xff]
    %v419 = vld [vmem:[%s14 + $0x88] sm:$0xff]
    %v420 = vld [vmem:[%s14 + $0x90] sm:$0xff]
    %v421 = vld [vmem:[%s14 + $0x98] sm:$0xff]
    %v422 = vld [vmem:[%s14 + $0xa0] sm:$0xff]
    %v423 = vld [vmem:[%s14 + $0xa8] sm:$0xff]
    %v424 = vld [vmem:[%s14 + $0xb0] sm:$0xff]
    %v425 = vld [vmem:[%s14 + $0xb8] sm:$0xff]
    %v426 = vld [vmem:[%s14 + $0xc0] sm:$0xff]
    %v427 = vld [vmem:[%s14 + $0xc8] sm:$0xff]
    %v428 = vld [vmem:[%s14 + $0xd0] sm:$0xff]
    %v429 = vld [vmem:[%s14 + $0xd8] sm:$0xff]
    %v430 = vld [vmem:[%s14 + $0xe0] sm:$0xff]
    %v431 = vld [vmem:[%s14 + $0xe8] sm:$0xff]
    %v432 = vld [vmem:[%s14 + $0xf0] sm:$0xff]
    %v433 = vld [vmem:[%s14 + $0xf8] sm:$0xff]
    %v435 = vsel %vm61, %v370, 0
    %v438 = vsel %vm61, %v371, 0
    %v441 = vsel %vm61, %v372, 0
    %v444 = vsel %vm61, %v373, 0
    %v447 = vsel %vm61, %v374, 0
    %v450 = vsel %vm61, %v375, 0
    %v453 = vsel %vm61, %v376, 0
    %v456 = vsel %vm61, %v377, 0
    %v459 = vsel %vm61, %v378, 0
    %v462 = vsel %vm61, %v379, 0
    %v465 = vsel %vm61, %v380, 0
    %v468 = vsel %vm61, %v381, 0
    %v471 = vsel %vm61, %v382, 0
    %v474 = vsel %vm61, %v383, 0
    %v477 = vsel %vm61, %v384, 0
    %v480 = vsel %vm61, %v385, 0
    %v483 = vsel %vm61, %v386, 0
    %v486 = vsel %vm61, %v387, 0
    %v489 = vsel %vm61, %v388, 0
    %v492 = vsel %vm61, %v389, 0
    %v495 = vsel %vm61, %v390, 0
    %v498 = vsel %vm61, %v391, 0
    %v501 = vsel %vm61, %v392, 0
    %v504 = vsel %vm61, %v393, 0
    %v507 = vsel %vm61, %v394, 0
    %v510 = vsel %vm61, %v395, 0
    %v513 = vsel %vm61, %v396, 0
    %v516 = vsel %vm61, %v397, 0
    %v519 = vsel %vm61, %v398, 0
    %v522 = vsel %vm61, %v399, 0
    %v525 = vsel %vm61, %v400, 0
    %v528 = vsel %vm61, %v401, 0
    %v531 = vsel %vm61, %v334, 0
    %v534 = vsel %vm61, %v335, 0
    %v537 = vsel %vm61, %v336, 0
    %v540 = vsel %vm61, %v337, 0
    %542 = vmatprep.subr.mxu0 0.0
    %543 = vmatpush1.xpose.msra.mxu0 0.0
    %544 = vmatprep.subr.mxu0 0.0
    %545 = vmatpush1.xpose.msra.mxu0 0.0
    %546 = vmatprep.subr.mxu0 0.0
    %547 = vmatpush1.xpose.msra.mxu0 0.0
    %548 = vmatprep.subr.mxu0 0.0
    %549 = vmatpush1.xpose.msra.mxu0 0.0
    %550 = vmatprep.subr.mxu0 0.0
    %551 = vmatpush1.xpose.msra.mxu0 0.0
    %552 = vmatprep.subr.mxu0 0.0
    %553 = vmatpush1.xpose.msra.mxu0 0.0
    %554 = vmatprep.subr.mxu0 0.0
    %555 = vmatpush1.xpose.msra.mxu0 0.0
    %556 = vmatprep.subr.mxu0 0.0
    %557 = vmatpush1.xpose.msra.mxu0 0.0
    %558 = vmatprep.subr.mxu0 0.0
    %559 = vmatpush1.xpose.msra.mxu0 0.0
    %560 = vmatprep.subr.mxu0 0.0
    %561 = vmatpush1.xpose.msra.mxu0 0.0
    %562 = vmatprep.subr.mxu0 0.0
    %563 = vmatpush1.xpose.msra.mxu0 0.0
    %564 = vmatprep.subr.mxu0 0.0
    %565 = vmatpush1.xpose.msra.mxu0 0.0
    %566 = vmatprep.subr.mxu0 0.0
    %567 = vmatpush1.xpose.msra.mxu0 %v540
    %568 = vmatprep.subr.mxu0 0.0
    %569 = vmatpush1.xpose.msra.mxu0 %v537
    %570 = vmatprep.subr.mxu0 0.0
    %571 = vmatpush1.xpose.msra.mxu0 %v534
    %572 = vmatprep.subr.mxu0 0.0
    %573 = vmatpush1.xpose.msra.mxu0 %v531
    %574 = vmatprep.subr.mxu0 0.0
    %575 = vmatpush2.xpose.msra.mxu0 0.0
    %576 = vmatprep.subr.mxu0 0.0
    %577 = vmatpush2.xpose.msra.mxu0 0.0
    %578 = vmatprep.subr.mxu0 0.0
    %579 = vmatpush2.xpose.msra.mxu0 0.0
    %580 = vmatprep.subr.mxu0 0.0
    %581 = vmatpush2.xpose.msra.mxu0 0.0
    %582 = vmatprep.subr.mxu0 0.0
    %583 = vmatpush2.xpose.msra.mxu0 0.0
    %584 = vmatprep.subr.mxu0 0.0
    %585 = vmatpush2.xpose.msra.mxu0 0.0
    %586 = vmatprep.subr.mxu0 0.0
    %587 = vmatpush2.xpose.msra.mxu0 0.0
    %588 = vmatprep.subr.mxu0 0.0
    %589 = vmatpush2.xpose.msra.mxu0 0.0
    %590 = vmatprep.subr.mxu0 0.0
    %591 = vmatpush2.xpose.msra.mxu0 0.0
    %592 = vmatprep.subr.mxu0 0.0
    %593 = vmatpush2.xpose.msra.mxu0 0.0
    %594 = vmatprep.subr.mxu0 0.0
    %595 = vmatpush2.xpose.msra.mxu0 0.0
    %596 = vmatprep.subr.mxu0 0.0
    %597 = vmatpush2.xpose.msra.mxu0 0.0
    %598 = vmatprep.subr.mxu0 0.0
    %599 = vmatpush2.xpose.msra.mxu0 0.0
    %600 = vmatprep.subr.mxu0 0.0
    %601 = vmatpush2.xpose.msra.mxu0 0.0
    %602 = vmatprep.subr.mxu0 0.0
    %603 = vmatpush2.xpose.msra.mxu0 0.0
    %604 = vmatprep.subr.mxu0 0.0
    %605 = vmatpush2.xpose.msra.mxu0 0.0
    %606 = vmatprep.mubr.f32.mxu0 0.0
    %607 = vmatmul.mubr.f32.gmra.mxu0 %v435
    %v608 = vpop.f32.mrf.mxu0
    %v609 = vadd.f32 %v402, %v608
    %v610 = vpop.f32.mrf.mxu0
    %611 = vmatprep.mubr.f32.mxu0 0.0
    %612 = vmatmul.mubr.f32.gmra.mxu0 %v438
    %v613 = vpop.f32.mrf.mxu0
    %v614 = vadd.f32 %v403, %v613
    %v615 = vpop.f32.mrf.mxu0
    %616 = vmatprep.mubr.f32.mxu0 0.0
    %617 = vmatmul.mubr.f32.gmra.mxu0 %v441
    %v618 = vpop.f32.mrf.mxu0
    %v619 = vadd.f32 %v404, %v618
    %v620 = vpop.f32.mrf.mxu0
    %621 = vmatprep.mubr.f32.mxu0 0.0
    %622 = vmatmul.mubr.f32.gmra.mxu0 %v444
    %v623 = vpop.f32.mrf.mxu0
    %v624 = vadd.f32 %v405, %v623
    %v625 = vpop.f32.mrf.mxu0
    %626 = vmatprep.mubr.f32.mxu0 0.0
    %627 = vmatmul.mubr.f32.gmra.mxu0 %v447
    %v628 = vpop.f32.mrf.mxu0
    %v629 = vadd.f32 %v406, %v628
    %v630 = vpop.f32.mrf.mxu0
    %631 = vmatprep.mubr.f32.mxu0 0.0
    %632 = vmatmul.mubr.f32.gmra.mxu0 %v450
    %v633 = vpop.f32.mrf.mxu0
    %v634 = vadd.f32 %v407, %v633
    %v635 = vpop.f32.mrf.mxu0
    %636 = vmatprep.mubr.f32.mxu0 0.0
    %637 = vmatmul.mubr.f32.gmra.mxu0 %v453
    %v638 = vpop.f32.mrf.mxu0
    %v639 = vadd.f32 %v408, %v638
    %v640 = vpop.f32.mrf.mxu0
    %641 = vmatprep.mubr.f32.mxu0 0.0
    %642 = vmatmul.mubr.f32.gmra.mxu0 %v456
    %v643 = vpop.f32.mrf.mxu0
    %v644 = vadd.f32 %v409, %v643
    %v645 = vpop.f32.mrf.mxu0
    %646 = vmatprep.mubr.f32.mxu0 0.0
    %647 = vmatmul.mubr.f32.gmra.mxu0 %v459
    %v648 = vpop.f32.mrf.mxu0
    %v649 = vadd.f32 %v410, %v648
    %v650 = vpop.f32.mrf.mxu0
    %651 = vmatprep.mubr.f32.mxu0 0.0
    %652 = vmatmul.mubr.f32.gmra.mxu0 %v462
    %v653 = vpop.f32.mrf.mxu0
    %v654 = vadd.f32 %v411, %v653
    %v655 = vpop.f32.mrf.mxu0
    %656 = vmatprep.mubr.f32.mxu0 0.0
    %657 = vmatmul.mubr.f32.gmra.mxu0 %v465
    %v658 = vpop.f32.mrf.mxu0
    %v659 = vadd.f32 %v412, %v658
    %v660 = vpop.f32.mrf.mxu0
    %661 = vmatprep.mubr.f32.mxu0 0.0
    %662 = vmatmul.mubr.f32.gmra.mxu0 %v468
    %v663 = vpop.f32.mrf.mxu0
    %v664 = vadd.f32 %v413, %v663
    %v665 = vpop.f32.mrf.mxu0
    %666 = vmatprep.mubr.f32.mxu0 0.0
    %667 = vmatmul.mubr.f32.gmra.mxu0 %v471
    %v668 = vpop.f32.mrf.mxu0
    %v669 = vadd.f32 %v414, %v668
    %v670 = vpop.f32.mrf.mxu0
    %671 = vmatprep.mubr.f32.mxu0 0.0
    %672 = vmatmul.mubr.f32.gmra.mxu0 %v474
    %v673 = vpop.f32.mrf.mxu0
    %v674 = vadd.f32 %v415, %v673
    %v675 = vpop.f32.mrf.mxu0
    %676 = vmatprep.mubr.f32.mxu0 0.0
    %677 = vmatmul.mubr.f32.gmra.mxu0 %v477
    %v678 = vpop.f32.mrf.mxu0
    %v679 = vadd.f32 %v416, %v678
    %v680 = vpop.f32.mrf.mxu0
    %681 = vmatprep.mubr.f32.mxu0 0.0
    %682 = vmatmul.mubr.f32.gmra.mxu0 %v480
    %v683 = vpop.f32.mrf.mxu0
    %v684 = vadd.f32 %v417, %v683
    %v685 = vpop.f32.mrf.mxu0
    %686 = vmatprep.mubr.f32.mxu0 0.0
    %687 = vmatmul.mubr.f32.gmra.mxu0 %v483
    %v688 = vpop.f32.mrf.mxu0
    %v689 = vadd.f32 %v418, %v688
    %v690 = vpop.f32.mrf.mxu0
    %691 = vmatprep.mubr.f32.mxu0 0.0
    %692 = vmatmul.mubr.f32.gmra.mxu0 %v486
    %v693 = vpop.f32.mrf.mxu0
    %v694 = vadd.f32 %v419, %v693
    %v695 = vpop.f32.mrf.mxu0
    %696 = vmatprep.mubr.f32.mxu0 0.0
    %697 = vmatmul.mubr.f32.gmra.mxu0 %v489
    %v698 = vpop.f32.mrf.mxu0
    %v699 = vadd.f32 %v420, %v698
    %v700 = vpop.f32.mrf.mxu0
    %701 = vmatprep.mubr.f32.mxu0 0.0
    %702 = vmatmul.mubr.f32.gmra.mxu0 %v492
    %v703 = vpop.f32.mrf.mxu0
    %v704 = vadd.f32 %v421, %v703
    %v705 = vpop.f32.mrf.mxu0
    %706 = vmatprep.mubr.f32.mxu0 0.0
    %707 = vmatmul.mubr.f32.gmra.mxu0 %v495
    %v708 = vpop.f32.mrf.mxu0
    %v709 = vadd.f32 %v422, %v708
    %v710 = vpop.f32.mrf.mxu0
    %711 = vmatprep.mubr.f32.mxu0 0.0
    %712 = vmatmul.mubr.f32.gmra.mxu0 %v498
    %v713 = vpop.f32.mrf.mxu0
    %v714 = vadd.f32 %v423, %v713
    %v715 = vpop.f32.mrf.mxu0
    %716 = vmatprep.mubr.f32.mxu0 0.0
    %717 = vmatmul.mubr.f32.gmra.mxu0 %v501
    %v718 = vpop.f32.mrf.mxu0
    %v719 = vadd.f32 %v424, %v718
    %v720 = vpop.f32.mrf.mxu0
    %721 = vmatprep.mubr.f32.mxu0 0.0
    %722 = vmatmul.mubr.f32.gmra.mxu0 %v504
    %v723 = vpop.f32.mrf.mxu0
    %v724 = vadd.f32 %v425, %v723
    %v725 = vpop.f32.mrf.mxu0
    %726 = vmatprep.mubr.f32.mxu0 0.0
    %727 = vmatmul.mubr.f32.gmra.mxu0 %v507
    %v728 = vpop.f32.mrf.mxu0
    %v729 = vadd.f32 %v426, %v728
    %v730 = vpop.f32.mrf.mxu0
    %731 = vmatprep.mubr.f32.mxu0 0.0
    %732 = vmatmul.mubr.f32.gmra.mxu0 %v510
    %v733 = vpop.f32.mrf.mxu0
    %v734 = vadd.f32 %v427, %v733
    %v735 = vpop.f32.mrf.mxu0
    %736 = vmatprep.mubr.f32.mxu0 0.0
    %737 = vmatmul.mubr.f32.gmra.mxu0 %v513
    %v738 = vpop.f32.mrf.mxu0
    %v739 = vadd.f32 %v428, %v738
    %v740 = vpop.f32.mrf.mxu0
    %741 = vmatprep.mubr.f32.mxu0 0.0
    %742 = vmatmul.mubr.f32.gmra.mxu0 %v516
    %v743 = vpop.f32.mrf.mxu0
    %v744 = vadd.f32 %v429, %v743
    %v745 = vpop.f32.mrf.mxu0
    %746 = vmatprep.mubr.f32.mxu0 0.0
    %747 = vmatmul.mubr.f32.gmra.mxu0 %v519
    %v748 = vpop.f32.mrf.mxu0
    %v749 = vadd.f32 %v430, %v748
    %v750 = vpop.f32.mrf.mxu0
    %751 = vmatprep.mubr.f32.mxu0 0.0
    %752 = vmatmul.mubr.f32.gmra.mxu0 %v522
    %v753 = vpop.f32.mrf.mxu0
    %v754 = vadd.f32 %v431, %v753
    %v755 = vpop.f32.mrf.mxu0
    %756 = vmatprep.mubr.f32.mxu0 0.0
    %757 = vmatmul.mubr.f32.gmra.mxu0 %v525
    %v758 = vpop.f32.mrf.mxu0
    %v759 = vadd.f32 %v432, %v758
    %v760 = vpop.f32.mrf.mxu0
    %761 = vmatprep.mubr.f32.mxu0 0.0
    %762 = vmatmul.mubr.f32.gmra.mxu0 %v528
    %v763 = vpop.f32.mrf.mxu0
    %v764 = vadd.f32 %v433, %v763
    %v765 = vpop.f32.mrf.mxu0
    %766 = vdwg.mxu0
    %vm767 = vcmask 261120
    %v768 = vsel %vm767, %v609, -inf
    %769 = vmax.xlane.f32.xlu0 %v768
    %v770 = vpop.xlane.xlu0 %769
    %v771 = vsel %vm767, %v614, -inf
    %772 = vmax.xlane.f32.xlu0 %v771
    %v773 = vpop.xlane.xlu0 %772
    %v774 = vsel %vm767, %v619, -inf
    %775 = vmax.xlane.f32.xlu0 %v774
    %v776 = vpop.xlane.xlu0 %775
    %v777 = vsel %vm767, %v624, -inf
    %778 = vmax.xlane.f32.xlu0 %v777
    %v779 = vpop.xlane.xlu0 %778
    %v780 = vsel %vm767, %v629, -inf
    %781 = vmax.xlane.f32.xlu0 %v780
    %v782 = vpop.xlane.xlu0 %781
    %v783 = vsel %vm767, %v634, -inf
    %784 = vmax.xlane.f32.xlu0 %v783
    %v785 = vpop.xlane.xlu0 %784
    %v786 = vsel %vm767, %v639, -inf
    %787 = vmax.xlane.f32.xlu0 %v786
    %v788 = vpop.xlane.xlu0 %787
    %v789 = vsel %vm767, %v644, -inf
    %790 = vmax.xlane.f32.xlu0 %v789
    %v791 = vpop.xlane.xlu0 %790
    %v792 = vsel %vm767, %v649, -inf
    %793 = vmax.xlane.f32.xlu0 %v792
    %v794 = vpop.xlane.xlu0 %793
    %v795 = vsel %vm767, %v654, -inf
    %796 = vmax.xlane.f32.xlu0 %v795
    %v797 = vpop.xlane.xlu0 %796
    %v798 = vsel %vm767, %v659, -inf
    %799 = vmax.xlane.f32.xlu0 %v798
    %v800 = vpop.xlane.xlu0 %799
    %v801 = vsel %vm767, %v664, -inf
    %802 = vmax.xlane.f32.xlu0 %v801
    %v803 = vpop.xlane.xlu0 %802
    %v804 = vsel %vm767, %v669, -inf
    %805 = vmax.xlane.f32.xlu0 %v804
    %v806 = vpop.xlane.xlu0 %805
    %v807 = vsel %vm767, %v674, -inf
    %808 = vmax.xlane.f32.xlu0 %v807
    %v809 = vpop.xlane.xlu0 %808
    %v810 = vsel %vm767, %v679, -inf
    %811 = vmax.xlane.f32.xlu0 %v810
    %v812 = vpop.xlane.xlu0 %811
    %v813 = vsel %vm767, %v684, -inf
    %814 = vmax.xlane.f32.xlu0 %v813
    %v815 = vpop.xlane.xlu0 %814
    %v816 = vsel %vm767, %v689, -inf
    %817 = vmax.xlane.f32.xlu0 %v816
    %v818 = vpop.xlane.xlu0 %817
    %v819 = vsel %vm767, %v694, -inf
    %820 = vmax.xlane.f32.xlu0 %v819
    %v821 = vpop.xlane.xlu0 %820
    %v822 = vsel %vm767, %v699, -inf
    %823 = vmax.xlane.f32.xlu0 %v822
    %v824 = vpop.xlane.xlu0 %823
    %v825 = vsel %vm767, %v704, -inf
    %826 = vmax.xlane.f32.xlu0 %v825
    %v827 = vpop.xlane.xlu0 %826
    %v828 = vsel %vm767, %v709, -inf
    %829 = vmax.xlane.f32.xlu0 %v828
    %v830 = vpop.xlane.xlu0 %829
    %v831 = vsel %vm767, %v714, -inf
    %832 = vmax.xlane.f32.xlu0 %v831
    %v833 = vpop.xlane.xlu0 %832
    %v834 = vsel %vm767, %v719, -inf
    %835 = vmax.xlane.f32.xlu0 %v834
    %v836 = vpop.xlane.xlu0 %835
    %v837 = vsel %vm767, %v724, -inf
    %838 = vmax.xlane.f32.xlu0 %v837
    %v839 = vpop.xlane.xlu0 %838
    %v840 = vsel %vm767, %v729, -inf
    %841 = vmax.xlane.f32.xlu0 %v840
    %v842 = vpop.xlane.xlu0 %841
    %v843 = vsel %vm767, %v734, -inf
    %844 = vmax.xlane.f32.xlu0 %v843
    %v845 = vpop.xlane.xlu0 %844
    %v846 = vsel %vm767, %v739, -inf
    %847 = vmax.xlane.f32.xlu0 %v846
    %v848 = vpop.xlane.xlu0 %847
    %v849 = vsel %vm767, %v744, -inf
    %850 = vmax.xlane.f32.xlu0 %v849
    %v851 = vpop.xlane.xlu0 %850
    %v852 = vsel %vm767, %v749, -inf
    %853 = vmax.xlane.f32.xlu0 %v852
    %v854 = vpop.xlane.xlu0 %853
    %v855 = vsel %vm767, %v754, -inf
    %856 = vmax.xlane.f32.xlu0 %v855
    %v857 = vpop.xlane.xlu0 %856
    %v858 = vsel %vm767, %v759, -inf
    %859 = vmax.xlane.f32.xlu0 %v858
    %v860 = vpop.xlane.xlu0 %859
    %v861 = vsel %vm767, %v764, -inf
    %862 = vmax.xlane.f32.xlu0 %v861
    %v863 = vpop.xlane.xlu0 %862
    %v864 = vsub.f32 %v609, %v770
    %v865 = vsub.f32 %v614, %v773
    %v866 = vsub.f32 %v619, %v776
    %v867 = vsub.f32 %v624, %v779
    %v868 = vsub.f32 %v629, %v782
    %v869 = vsub.f32 %v634, %v785
    %v870 = vsub.f32 %v639, %v788
    %v871 = vsub.f32 %v644, %v791
    %v872 = vsub.f32 %v649, %v794
    %v873 = vsub.f32 %v654, %v797
    %v874 = vsub.f32 %v659, %v800
    %v875 = vsub.f32 %v664, %v803
    %v876 = vsub.f32 %v669, %v806
    %v877 = vsub.f32 %v674, %v809
    %v878 = vsub.f32 %v679, %v812
    %v879 = vsub.f32 %v684, %v815
    %v880 = vsub.f32 %v689, %v818
    %v881 = vsub.f32 %v694, %v821
    %v882 = vsub.f32 %v699, %v824
    %v883 = vsub.f32 %v704, %v827
    %v884 = vsub.f32 %v709, %v830
    %v885 = vsub.f32 %v714, %v833
    %v886 = vsub.f32 %v719, %v836
    %v887 = vsub.f32 %v724, %v839
    %v888 = vsub.f32 %v729, %v842
    %v889 = vsub.f32 %v734, %v845
    %v890 = vsub.f32 %v739, %v848
    %v891 = vsub.f32 %v744, %v851
    %v892 = vsub.f32 %v749, %v854
    %v893 = vsub.f32 %v754, %v857
    %v894 = vsub.f32 %v759, %v860
    %v895 = vsub.f32 %v764, %v863
    %v896 = vmul.f32 %v864, 1.442695
    %v897 = vpow.pop %v896
    %v898 = vmul.f32 %v865, 1.442695
    %v899 = vpow.pop %v898
    %v900 = vmul.f32 %v866, 1.442695
    %v901 = vpow.pop %v900
    %v902 = vmul.f32 %v867, 1.442695
    %v903 = vpow.pop %v902
    %v904 = vmul.f32 %v868, 1.442695
    %v905 = vpow.pop %v904
    %v906 = vmul.f32 %v869, 1.442695
    %v907 = vpow.pop %v906
    %v908 = vmul.f32 %v870, 1.442695
    %v909 = vpow.pop %v908
    %v910 = vmul.f32 %v871, 1.442695
    %v911 = vpow.pop %v910
    %v912 = vmul.f32 %v872, 1.442695
    %v913 = vpow.pop %v912
    %v914 = vmul.f32 %v873, 1.442695
    %v915 = vpow.pop %v914
    %v916 = vmul.f32 %v874, 1.442695
    %v917 = vpow.pop %v916
    %v918 = vmul.f32 %v875, 1.442695
    %v919 = vpow.pop %v918
    %v920 = vmul.f32 %v876, 1.442695
    %v921 = vpow.pop %v920
    %v922 = vmul.f32 %v877, 1.442695
    %v923 = vpow.pop %v922
    %v924 = vmul.f32 %v878, 1.442695
    %v925 = vpow.pop %v924
    %v926 = vmul.f32 %v879, 1.442695
    %v927 = vpow.pop %v926
    %v928 = vmul.f32 %v880, 1.442695
    %v929 = vpow.pop %v928
    %v930 = vmul.f32 %v881, 1.442695
    %v931 = vpow.pop %v930
    %v932 = vmul.f32 %v882, 1.442695
    %v933 = vpow.pop %v932
    %v934 = vmul.f32 %v883, 1.442695
    %v935 = vpow.pop %v934
    %v936 = vmul.f32 %v884, 1.442695
    %v937 = vpow.pop %v936
    %v938 = vmul.f32 %v885, 1.442695
    %v939 = vpow.pop %v938
    %v940 = vmul.f32 %v886, 1.442695
    %v941 = vpow.pop %v940
    %v942 = vmul.f32 %v887, 1.442695
    %v943 = vpow.pop %v942
    %v944 = vmul.f32 %v888, 1.442695
    %v945 = vpow.pop %v944
    %v946 = vmul.f32 %v889, 1.442695
    %v947 = vpow.pop %v946
    %v948 = vmul.f32 %v890, 1.442695
    %v949 = vpow.pop %v948
    %v950 = vmul.f32 %v891, 1.442695
    %v951 = vpow.pop %v950
    %v952 = vmul.f32 %v892, 1.442695
    %v953 = vpow.pop %v952
    %v954 = vmul.f32 %v893, 1.442695
    %v955 = vpow.pop %v954
    %v956 = vmul.f32 %v894, 1.442695
    %v957 = vpow.pop %v956
    %v958 = vmul.f32 %v895, 1.442695
    %v959 = vpow.pop %v958
    %v960 = vsel %vm767, %v897, 0.0
    %961 = vadd.xlane.f32.xlu0 %v960
    %v962 = vpop.xlane.xlu0 %961
    %v963 = vsel %vm767, %v899, 0.0
    %964 = vadd.xlane.f32.xlu0 %v963
    %v965 = vpop.xlane.xlu0 %964
    %v966 = vsel %vm767, %v901, 0.0
    %967 = vadd.xlane.f32.xlu0 %v966
    %v968 = vpop.xlane.xlu0 %967
    %v969 = vsel %vm767, %v903, 0.0
    %970 = vadd.xlane.f32.xlu0 %v969
    %v971 = vpop.xlane.xlu0 %970
    %v972 = vsel %vm767, %v905, 0.0
    %973 = vadd.xlane.f32.xlu0 %v972
    %v974 = vpop.xlane.xlu0 %973
    %v975 = vsel %vm767, %v907, 0.0
    %976 = vadd.xlane.f32.xlu0 %v975
    %v977 = vpop.xlane.xlu0 %976
    %v978 = vsel %vm767, %v909, 0.0
    %979 = vadd.xlane.f32.xlu0 %v978
    %v980 = vpop.xlane.xlu0 %979
    %v981 = vsel %vm767, %v911, 0.0
    %982 = vadd.xlane.f32.xlu0 %v981
    %v983 = vpop.xlane.xlu0 %982
    %v984 = vsel %vm767, %v913, 0.0
    %985 = vadd.xlane.f32.xlu0 %v984
    %v986 = vpop.xlane.xlu0 %985
    %v987 = vsel %vm767, %v915, 0.0
    %988 = vadd.xlane.f32.xlu0 %v987
    %v989 = vpop.xlane.xlu0 %988
    %v990 = vsel %vm767, %v917, 0.0
    %991 = vadd.xlane.f32.xlu0 %v990
    %v992 = vpop.xlane.xlu0 %991
    %v993 = vsel %vm767, %v919, 0.0
    %994 = vadd.xlane.f32.xlu0 %v993
    %v995 = vpop.xlane.xlu0 %994
    %v996 = vsel %vm767, %v921, 0.0
    %997 = vadd.xlane.f32.xlu0 %v996
    %v998 = vpop.xlane.xlu0 %997
    %v999 = vsel %vm767, %v923, 0.0
    %1000 = vadd.xlane.f32.xlu0 %v999
    %v1001 = vpop.xlane.xlu0 %1000
    %v1002 = vsel %vm767, %v925, 0.0
    %1003 = vadd.xlane.f32.xlu0 %v1002
    %v1004 = vpop.xlane.xlu0 %1003
    %v1005 = vsel %vm767, %v927, 0.0
    %1006 = vadd.xlane.f32.xlu0 %v1005
    %v1007 = vpop.xlane.xlu0 %1006
    %v1008 = vsel %vm767, %v929, 0.0
    %1009 = vadd.xlane.f32.xlu0 %v1008
    %v1010 = vpop.xlane.xlu0 %1009
    %v1011 = vsel %vm767, %v931, 0.0
    %1012 = vadd.xlane.f32.xlu0 %v1011
    %v1013 = vpop.xlane.xlu0 %1012
    %v1014 = vsel %vm767, %v933, 0.0
    %1015 = vadd.xlane.f32.xlu0 %v1014
    %v1016 = vpop.xlane.xlu0 %1015
    %v1017 = vsel %vm767, %v935, 0.0
    %1018 = vadd.xlane.f32.xlu0 %v1017
    %v1019 = vpop.xlane.xlu0 %1018
    %v1020 = vsel %vm767, %v937, 0.0
    %1021 = vadd.xlane.f32.xlu0 %v1020
    %v1022 = vpop.xlane.xlu0 %1021
    %v1023 = vsel %vm767, %v939, 0.0
    %1024 = vadd.xlane.f32.xlu0 %v1023
    %v1025 = vpop.xlane.xlu0 %1024
    %v1026 = vsel %vm767, %v941, 0.0
    %1027 = vadd.xlane.f32.xlu0 %v1026
    %v1028 = vpop.xlane.xlu0 %1027
    %v1029 = vsel %vm767, %v943, 0.0
    %1030 = vadd.xlane.f32.xlu0 %v1029
    %v1031 = vpop.xlane.xlu0 %1030
    %v1032 = vsel %vm767, %v945, 0.0
    %1033 = vadd.xlane.f32.xlu0 %v1032
    %v1034 = vpop.xlane.xlu0 %1033
    %v1035 = vsel %vm767, %v947, 0.0
    %1036 = vadd.xlane.f32.xlu0 %v1035
    %v1037 = vpop.xlane.xlu0 %1036
    %v1038 = vsel %vm767, %v949, 0.0
    %1039 = vadd.xlane.f32.xlu0 %v1038
    %v1040 = vpop.xlane.xlu0 %1039
    %v1041 = vsel %vm767, %v951, 0.0
    %1042 = vadd.xlane.f32.xlu0 %v1041
    %v1043 = vpop.xlane.xlu0 %1042
    %v1044 = vsel %vm767, %v953, 0.0
    %1045 = vadd.xlane.f32.xlu0 %v1044
    %v1046 = vpop.xlane.xlu0 %1045
    %v1047 = vsel %vm767, %v955, 0.0
    %1048 = vadd.xlane.f32.xlu0 %v1047
    %v1049 = vpop.xlane.xlu0 %1048
    %v1050 = vsel %vm767, %v957, 0.0
    %1051 = vadd.xlane.f32.xlu0 %v1050
    %v1052 = vpop.xlane.xlu0 %1051
    %v1053 = vsel %vm767, %v959, 0.0
    %1054 = vadd.xlane.f32.xlu0 %v1053
    %v1055 = vpop.xlane.xlu0 %1054
    %v1056 = vrcp.pop %v962
    %v1057 = vrcp.pop %v965
    %v1058 = vrcp.pop %v968
    %v1059 = vrcp.pop %v971
    %v1060 = vrcp.pop %v974
    %v1061 = vrcp.pop %v977
    %v1062 = vrcp.pop %v980
    %v1063 = vrcp.pop %v983
    %v1064 = vrcp.pop %v986
    %v1065 = vrcp.pop %v989
    %v1066 = vrcp.pop %v992
    %v1067 = vrcp.pop %v995
    %v1068 = vrcp.pop %v998
    %v1069 = vrcp.pop %v1001
    %v1070 = vrcp.pop %v1004
    %v1071 = vrcp.pop %v1007
    %v1072 = vrcp.pop %v1010
    %v1073 = vrcp.pop %v1013
    %v1074 = vrcp.pop %v1016
    %v1075 = vrcp.pop %v1019
    %v1076 = vrcp.pop %v1022
    %v1077 = vrcp.pop %v1025
    %v1078 = vrcp.pop %v1028
    %v1079 = vrcp.pop %v1031
    %v1080 = vrcp.pop %v1034
    %v1081 = vrcp.pop %v1037
    %v1082 = vrcp.pop %v1040
    %v1083 = vrcp.pop %v1043
    %v1084 = vrcp.pop %v1046
    %v1085 = vrcp.pop %v1049
    %v1086 = vrcp.pop %v1052
    %v1087 = vrcp.pop %v1055
    %v1088 = vmul.f32 %v897, %v1056
    %v1089 = vmul.f32 %v899, %v1057
    %v1090 = vmul.f32 %v901, %v1058
    %v1091 = vmul.f32 %v903, %v1059
    %v1092 = vmul.f32 %v905, %v1060
    %v1093 = vmul.f32 %v907, %v1061
    %v1094 = vmul.f32 %v909, %v1062
    %v1095 = vmul.f32 %v911, %v1063
    %v1096 = vmul.f32 %v913, %v1064
    %v1097 = vmul.f32 %v915, %v1065
    %v1098 = vmul.f32 %v917, %v1066
    %v1099 = vmul.f32 %v919, %v1067
    %v1100 = vmul.f32 %v921, %v1068
    %v1101 = vmul.f32 %v923, %v1069
    %v1102 = vmul.f32 %v925, %v1070
    %v1103 = vmul.f32 %v927, %v1071
    %v1104 = vmul.f32 %v929, %v1072
    %v1105 = vmul.f32 %v931, %v1073
    %v1106 = vmul.f32 %v933, %v1074
    %v1107 = vmul.f32 %v935, %v1075
    %v1108 = vmul.f32 %v937, %v1076
    %v1109 = vmul.f32 %v939, %v1077
    %v1110 = vmul.f32 %v941, %v1078
    %v1111 = vmul.f32 %v943, %v1079
    %v1112 = vmul.f32 %v945, %v1080
    %v1113 = vmul.f32 %v947, %v1081
    %v1114 = vmul.f32 %v949, %v1082
    %v1115 = vmul.f32 %v951, %v1083
    %v1116 = vmul.f32 %v953, %v1084
    %v1117 = vmul.f32 %v955, %v1085
    %v1118 = vmul.f32 %v957, %v1086
    %v1119 = vmul.f32 %v959, %v1087
    %v1121 = vsel %vm767, %v1088, 0
    %v1124 = vsel %vm767, %v1089, 0
    %v1127 = vsel %vm767, %v1090, 0
    %v1130 = vsel %vm767, %v1091, 0
    %v1133 = vsel %vm767, %v1092, 0
    %v1136 = vsel %vm767, %v1093, 0
    %v1139 = vsel %vm767, %v1094, 0
    %v1142 = vsel %vm767, %v1095, 0
    %v1145 = vsel %vm767, %v1096, 0
    %v1148 = vsel %vm767, %v1097, 0
    %v1151 = vsel %vm767, %v1098, 0
    %v1154 = vsel %vm767, %v1099, 0
    %v1157 = vsel %vm767, %v1100, 0
    %v1160 = vsel %vm767, %v1101, 0
    %v1163 = vsel %vm767, %v1102, 0
    %v1166 = vsel %vm767, %v1103, 0
    %v1169 = vsel %vm767, %v1104, 0
    %v1172 = vsel %vm767, %v1105, 0
    %v1175 = vsel %vm767, %v1106, 0
    %v1178 = vsel %vm767, %v1107, 0
    %v1181 = vsel %vm767, %v1108, 0
    %v1184 = vsel %vm767, %v1109, 0
    %v1187 = vsel %vm767, %v1110, 0
    %v1190 = vsel %vm767, %v1111, 0
    %v1193 = vsel %vm767, %v1112, 0
    %v1196 = vsel %vm767, %v1113, 0
    %v1199 = vsel %vm767, %v1114, 0
    %v1202 = vsel %vm767, %v1115, 0
    %v1205 = vsel %vm767, %v1116, 0
    %v1208 = vsel %vm767, %v1117, 0
    %v1211 = vsel %vm767, %v1118, 0
    %v1214 = vsel %vm767, %v1119, 0
    %1216 = vmatprep.subr.mxu0 0.0
    %1217 = vmatpush1.msra.mxu0 0.0
    %1218 = vmatprep.subr.mxu0 0.0
    %1219 = vmatpush1.msra.mxu0 0.0
    %1220 = vmatprep.subr.mxu0 0.0
    %1221 = vmatpush1.msra.mxu0 0.0
    %1222 = vmatprep.subr.mxu0 0.0
    %1223 = vmatpush1.msra.mxu0 0.0
    %1224 = vmatprep.subr.mxu0 0.0
    %1225 = vmatpush1.msra.mxu0 0.0
    %1226 = vmatprep.subr.mxu0 0.0
    %1227 = vmatpush1.msra.mxu0 0.0
    %1228 = vmatprep.subr.mxu0 0.0
    %1229 = vmatpush1.msra.mxu0 0.0
    %1230 = vmatprep.subr.mxu0 0.0
    %1231 = vmatpush1.msra.mxu0 0.0
    %1232 = vmatprep.subr.mxu0 0.0
    %1233 = vmatpush1.msra.mxu0 0.0
    %1234 = vmatprep.subr.mxu0 0.0
    %1235 = vmatpush1.msra.mxu0 0.0
    %1236 = vmatprep.subr.mxu0 0.0
    %1237 = vmatpush1.msra.mxu0 0.0
    %1238 = vmatprep.subr.mxu0 0.0
    %1239 = vmatpush1.msra.mxu0 0.0
    %1240 = vmatprep.subr.mxu0 0.0
    %1241 = vmatpush1.msra.mxu0 %v220
    %1242 = vmatprep.subr.mxu0 0.0
    %1243 = vmatpush1.msra.mxu0 %v216
    %1244 = vmatprep.subr.mxu0 0.0
    %1245 = vmatpush1.msra.mxu0 %v210
    %1246 = vmatprep.subr.mxu0 0.0
    %1247 = vmatpush1.msra.mxu0 %v206
    %1248 = vmatprep.subr.mxu0 0.0
    %1249 = vmatpush2.msra.mxu0 0.0
    %1250 = vmatprep.subr.mxu0 0.0
    %1251 = vmatpush2.msra.mxu0 0.0
    %1252 = vmatprep.subr.mxu0 0.0
    %1253 = vmatpush2.msra.mxu0 0.0
    %1254 = vmatprep.subr.mxu0 0.0
    %1255 = vmatpush2.msra.mxu0 0.0
    %1256 = vmatprep.subr.mxu0 0.0
    %1257 = vmatpush2.msra.mxu0 0.0
    %1258 = vmatprep.subr.mxu0 0.0
    %1259 = vmatpush2.msra.mxu0 0.0
    %1260 = vmatprep.subr.mxu0 0.0
    %1261 = vmatpush2.msra.mxu0 0.0
    %1262 = vmatprep.subr.mxu0 0.0
    %1263 = vmatpush2.msra.mxu0 0.0
    %1264 = vmatprep.subr.mxu0 0.0
    %1265 = vmatpush2.msra.mxu0 0.0
    %1266 = vmatprep.subr.mxu0 0.0
    %1267 = vmatpush2.msra.mxu0 0.0
    %1268 = vmatprep.subr.mxu0 0.0
    %1269 = vmatpush2.msra.mxu0 0.0
    %1270 = vmatprep.subr.mxu0 0.0
    %1271 = vmatpush2.msra.mxu0 0.0
    %1272 = vmatprep.subr.mxu0 0.0
    %1273 = vmatpush2.msra.mxu0 0.0
    %1274 = vmatprep.subr.mxu0 0.0
    %1275 = vmatpush2.msra.mxu0 0.0
    %1276 = vmatprep.subr.mxu0 0.0
    %1277 = vmatpush2.msra.mxu0 0.0
    %1278 = vmatprep.subr.mxu0 0.0
    %1279 = vmatpush2.msra.mxu0 0.0
    %1280 = vmatprep.mubr.f32.mxu0 0.0
    %1281 = vmatmul.mubr.f32.gmra.mxu0 %v1121
    %v1282 = vpop.f32.mrf.mxu0
    %v1283 = vadd.f32 0.0, %v1282
    %v1284 = vpop.f32.mrf.mxu0
    %1285 = vmatprep.mubr.f32.mxu0 0.0
    %1286 = vmatmul.mubr.f32.gmra.mxu0 %v1124
    %v1287 = vpop.f32.mrf.mxu0
    %v1288 = vadd.f32 0.0, %v1287
    %v1289 = vpop.f32.mrf.mxu0
    %1290 = vmatprep.mubr.f32.mxu0 0.0
    %1291 = vmatmul.mubr.f32.gmra.mxu0 %v1127
    %v1292 = vpop.f32.mrf.mxu0
    %v1293 = vadd.f32 0.0, %v1292
    %v1294 = vpop.f32.mrf.mxu0
    %1295 = vmatprep.mubr.f32.mxu0 0.0
    %1296 = vmatmul.mubr.f32.gmra.mxu0 %v1130
    %v1297 = vpop.f32.mrf.mxu0
    %v1298 = vadd.f32 0.0, %v1297
    %v1299 = vpop.f32.mrf.mxu0
    %1300 = vmatprep.mubr.f32.mxu0 0.0
    %1301 = vmatmul.mubr.f32.gmra.mxu0 %v1133
    %v1302 = vpop.f32.mrf.mxu0
    %v1303 = vadd.f32 0.0, %v1302
    %v1304 = vpop.f32.mrf.mxu0
    %1305 = vmatprep.mubr.f32.mxu0 0.0
    %1306 = vmatmul.mubr.f32.gmra.mxu0 %v1136
    %v1307 = vpop.f32.mrf.mxu0
    %v1308 = vadd.f32 0.0, %v1307
    %v1309 = vpop.f32.mrf.mxu0
    %1310 = vmatprep.mubr.f32.mxu0 0.0
    %1311 = vmatmul.mubr.f32.gmra.mxu0 %v1139
    %v1312 = vpop.f32.mrf.mxu0
    %v1313 = vadd.f32 0.0, %v1312
    %v1314 = vpop.f32.mrf.mxu0
    %1315 = vmatprep.mubr.f32.mxu0 0.0
    %1316 = vmatmul.mubr.f32.gmra.mxu0 %v1142
    %v1317 = vpop.f32.mrf.mxu0
    %v1318 = vadd.f32 0.0, %v1317
    %v1319 = vpop.f32.mrf.mxu0
    %1320 = vmatprep.mubr.f32.mxu0 0.0
    %1321 = vmatmul.mubr.f32.gmra.mxu0 %v1145
    %v1322 = vpop.f32.mrf.mxu0
    %v1323 = vadd.f32 0.0, %v1322
    %v1324 = vpop.f32.mrf.mxu0
    %1325 = vmatprep.mubr.f32.mxu0 0.0
    %1326 = vmatmul.mubr.f32.gmra.mxu0 %v1148
    %v1327 = vpop.f32.mrf.mxu0
    %v1328 = vadd.f32 0.0, %v1327
    %v1329 = vpop.f32.mrf.mxu0
    %1330 = vmatprep.mubr.f32.mxu0 0.0
    %1331 = vmatmul.mubr.f32.gmra.mxu0 %v1151
    %v1332 = vpop.f32.mrf.mxu0
    %v1333 = vadd.f32 0.0, %v1332
    %v1334 = vpop.f32.mrf.mxu0
    %1335 = vmatprep.mubr.f32.mxu0 0.0
    %1336 = vmatmul.mubr.f32.gmra.mxu0 %v1154
    %v1337 = vpop.f32.mrf.mxu0
    %v1338 = vadd.f32 0.0, %v1337
    %v1339 = vpop.f32.mrf.mxu0
    %1340 = vmatprep.mubr.f32.mxu0 0.0
    %1341 = vmatmul.mubr.f32.gmra.mxu0 %v1157
    %v1342 = vpop.f32.mrf.mxu0
    %v1343 = vadd.f32 0.0, %v1342
    %v1344 = vpop.f32.mrf.mxu0
    %1345 = vmatprep.mubr.f32.mxu0 0.0
    %1346 = vmatmul.mubr.f32.gmra.mxu0 %v1160
    %v1347 = vpop.f32.mrf.mxu0
    %v1348 = vadd.f32 0.0, %v1347
    %v1349 = vpop.f32.mrf.mxu0
    %1350 = vmatprep.mubr.f32.mxu0 0.0
    %1351 = vmatmul.mubr.f32.gmra.mxu0 %v1163
    %v1352 = vpop.f32.mrf.mxu0
    %v1353 = vadd.f32 0.0, %v1352
    %v1354 = vpop.f32.mrf.mxu0
    %1355 = vmatprep.mubr.f32.mxu0 0.0
    %1356 = vmatmul.mubr.f32.gmra.mxu0 %v1166
    %v1357 = vpop.f32.mrf.mxu0
    %v1358 = vadd.f32 0.0, %v1357
    %v1359 = vpop.f32.mrf.mxu0
    %1360 = vmatprep.mubr.f32.mxu0 0.0
    %1361 = vmatmul.mubr.f32.gmra.mxu0 %v1169
    %v1362 = vpop.f32.mrf.mxu0
    %v1363 = vadd.f32 0.0, %v1362
    %v1364 = vpop.f32.mrf.mxu0
    %1365 = vmatprep.mubr.f32.mxu0 0.0
    %1366 = vmatmul.mubr.f32.gmra.mxu0 %v1172
    %v1367 = vpop.f32.mrf.mxu0
    %v1368 = vadd.f32 0.0, %v1367
    %v1369 = vpop.f32.mrf.mxu0
    %1370 = vmatprep.mubr.f32.mxu0 0.0
    %1371 = vmatmul.mubr.f32.gmra.mxu0 %v1175
    %v1372 = vpop.f32.mrf.mxu0
    %v1373 = vadd.f32 0.0, %v1372
    %v1374 = vpop.f32.mrf.mxu0
    %1375 = vmatprep.mubr.f32.mxu0 0.0
    %1376 = vmatmul.mubr.f32.gmra.mxu0 %v1178
    %v1377 = vpop.f32.mrf.mxu0
    %v1378 = vadd.f32 0.0, %v1377
    %v1379 = vpop.f32.mrf.mxu0
    %1380 = vmatprep.mubr.f32.mxu0 0.0
    %1381 = vmatmul.mubr.f32.gmra.mxu0 %v1181
    %v1382 = vpop.f32.mrf.mxu0
    %v1383 = vadd.f32 0.0, %v1382
    %v1384 = vpop.f32.mrf.mxu0
    %1385 = vmatprep.mubr.f32.mxu0 0.0
    %1386 = vmatmul.mubr.f32.gmra.mxu0 %v1184
    %v1387 = vpop.f32.mrf.mxu0
    %v1388 = vadd.f32 0.0, %v1387
    %v1389 = vpop.f32.mrf.mxu0
    %1390 = vmatprep.mubr.f32.mxu0 0.0
    %1391 = vmatmul.mubr.f32.gmra.mxu0 %v1187
    %v1392 = vpop.f32.mrf.mxu0
    %v1393 = vadd.f32 0.0, %v1392
    %v1394 = vpop.f32.mrf.mxu0
    %1395 = vmatprep.mubr.f32.mxu0 0.0
    %1396 = vmatmul.mubr.f32.gmra.mxu0 %v1190
    %v1397 = vpop.f32.mrf.mxu0
    %v1398 = vadd.f32 0.0, %v1397
    %v1399 = vpop.f32.mrf.mxu0
    %1400 = vmatprep.mubr.f32.mxu0 0.0
    %1401 = vmatmul.mubr.f32.gmra.mxu0 %v1193
    %v1402 = vpop.f32.mrf.mxu0
    %v1403 = vadd.f32 0.0, %v1402
    %v1404 = vpop.f32.mrf.mxu0
    %1405 = vmatprep.mubr.f32.mxu0 0.0
    %1406 = vmatmul.mubr.f32.gmra.mxu0 %v1196
    %v1407 = vpop.f32.mrf.mxu0
    %v1408 = vadd.f32 0.0, %v1407
    %v1409 = vpop.f32.mrf.mxu0
    %1410 = vmatprep.mubr.f32.mxu0 0.0
    %1411 = vmatmul.mubr.f32.gmra.mxu0 %v1199
    %v1412 = vpop.f32.mrf.mxu0
    %v1413 = vadd.f32 0.0, %v1412
    %v1414 = vpop.f32.mrf.mxu0
    %1415 = vmatprep.mubr.f32.mxu0 0.0
    %1416 = vmatmul.mubr.f32.gmra.mxu0 %v1202
    %v1417 = vpop.f32.mrf.mxu0
    %v1418 = vadd.f32 0.0, %v1417
    %v1419 = vpop.f32.mrf.mxu0
    %1420 = vmatprep.mubr.f32.mxu0 0.0
    %1421 = vmatmul.mubr.f32.gmra.mxu0 %v1205
    %v1422 = vpop.f32.mrf.mxu0
    %v1423 = vadd.f32 0.0, %v1422
    %v1424 = vpop.f32.mrf.mxu0
    %1425 = vmatprep.mubr.f32.mxu0 0.0
    %1426 = vmatmul.mubr.f32.gmra.mxu0 %v1208
    %v1427 = vpop.f32.mrf.mxu0
    %v1428 = vadd.f32 0.0, %v1427
    %v1429 = vpop.f32.mrf.mxu0
    %1430 = vmatprep.mubr.f32.mxu0 0.0
    %1431 = vmatmul.mubr.f32.gmra.mxu0 %v1211
    %v1432 = vpop.f32.mrf.mxu0
    %v1433 = vadd.f32 0.0, %v1432
    %v1434 = vpop.f32.mrf.mxu0
    %1435 = vmatprep.mubr.f32.mxu0 0.0
    %1436 = vmatmul.mubr.f32.gmra.mxu0 %v1214
    %v1437 = vpop.f32.mrf.mxu0
    %v1438 = vadd.f32 0.0, %v1437
    %v1439 = vpop.f32.mrf.mxu0
    %1440 = vdwg.mxu0
    %v1441 = vmul.f32 %v1283, %v338
    %v1442 = vmul.f32 %v1288, %v339
    %v1443 = vmul.f32 %v1293, %v340
    %v1444 = vmul.f32 %v1298, %v341
    %v1445 = vmul.f32 %v1303, %v342
    %v1446 = vmul.f32 %v1308, %v343
    %v1447 = vmul.f32 %v1313, %v344
    %v1448 = vmul.f32 %v1318, %v345
    %v1449 = vmul.f32 %v1323, %v346
    %v1450 = vmul.f32 %v1328, %v347
    %v1451 = vmul.f32 %v1333, %v348
    %v1452 = vmul.f32 %v1338, %v349
    %v1453 = vmul.f32 %v1343, %v350
    %v1454 = vmul.f32 %v1348, %v351
    %v1455 = vmul.f32 %v1353, %v352
    %v1456 = vmul.f32 %v1358, %v353
    %v1457 = vmul.f32 %v1363, %v354
    %v1458 = vmul.f32 %v1368, %v355
    %v1459 = vmul.f32 %v1373, %v356
    %v1460 = vmul.f32 %v1378, %v357
    %v1461 = vmul.f32 %v1383, %v358
    %v1462 = vmul.f32 %v1388, %v359
    %v1463 = vmul.f32 %v1393, %v360
    %v1464 = vmul.f32 %v1398, %v361
    %v1465 = vmul.f32 %v1403, %v362
    %v1466 = vmul.f32 %v1408, %v363
    %v1467 = vmul.f32 %v1413, %v364
    %v1468 = vmul.f32 %v1418, %v365
    %v1469 = vmul.f32 %v1423, %v366
    %v1470 = vmul.f32 %v1428, %v367
    %v1471 = vmul.f32 %v1433, %v368
    %v1472 = vmul.f32 %v1438, %v369
    %v1473 = vadd.f32 %v1441, %v1445
    %v1474 = vadd.f32 %v1442, %v1446
    %v1475 = vadd.f32 %v1443, %v1447
    %v1476 = vadd.f32 %v1444, %v1448
    %v1477 = vadd.f32 %v1473, %v1449
    %v1478 = vadd.f32 %v1474, %v1450
    %v1479 = vadd.f32 %v1475, %v1451
    %v1480 = vadd.f32 %v1476, %v1452
    %v1481 = vadd.f32 %v1477, %v1453
    %v1482 = vadd.f32 %v1478, %v1454
    %v1483 = vadd.f32 %v1479, %v1455
    %v1484 = vadd.f32 %v1480, %v1456
    %v1485 = vadd.f32 %v1481, %v1457
    %v1486 = vadd.f32 %v1482, %v1458
    %v1487 = vadd.f32 %v1483, %v1459
    %v1488 = vadd.f32 %v1484, %v1460
    %v1489 = vadd.f32 %v1485, %v1461
    %v1490 = vadd.f32 %v1486, %v1462
    %v1491 = vadd.f32 %v1487, %v1463
    %v1492 = vadd.f32 %v1488, %v1464
    %v1493 = vadd.f32 %v1489, %v1465
    %v1494 = vadd.f32 %v1490, %v1466
    %v1495 = vadd.f32 %v1491, %v1467
    %v1496 = vadd.f32 %v1492, %v1468
    %v1497 = vadd.f32 %v1493, %v1469
    %v1498 = vadd.f32 %v1494, %v1470
    %v1499 = vadd.f32 %v1495, %v1471
    %v1500 = vadd.f32 %v1496, %v1472
    %v1501 = vpack.c.bf16 %v1498, %v1497
    %v1502 = vpack.c.bf16 %v1500, %v1499
    %v1503 = vld [vmem:[%s5] sm:$0xf]
    %v1504 = vld [vmem:[%s5 + $0x4] sm:$0xf]
    %v1505 = vld [vmem:[%s5 + $0x8] sm:$0xf]
    %v1506 = vld [vmem:[%s5 + $0xc] sm:$0xf]
    %v1507 = vld [vmem:[%s5 + $0x10] sm:$0xf]
    %v1508 = vld [vmem:[%s5 + $0x14] sm:$0xf]
    %v1509 = vld [vmem:[%s5 + $0x18] sm:$0xf]
    %v1510 = vld [vmem:[%s5 + $0x1c] sm:$0xf]
    %v1511 = vld [vmem:[%s6] sm:$0x1]
    %v1513 = vlaneseq
    %v1514 = vshrl.u32 %v1513, 7
    %v1515 = vsub.s32 0, %v1514
    %v1516 = vrot.slane %v1511, %v1515
    %v1526 = vunpack.c.l.b16 %v1503
    %v1527 = vunpack.c.l.b16 %v1504
    %v1528 = vunpack.c.l.b16 %v1505
    %v1529 = vunpack.c.l.b16 %v1506
    %v1530 = vunpack.c.l.b16 %v1507
    %v1531 = vunpack.c.l.b16 %v1508
    %v1532 = vunpack.c.l.b16 %v1509
    %v1533 = vunpack.c.l.b16 %v1510
    %v1534 = vpack.c.b16 %v1527, %v1526
    %v1535 = vpack.c.b16 %v1529, %v1528
    %v1536 = vpack.c.b16 %v1531, %v1530
    %v1537 = vpack.c.b16 %v1533, %v1532
    %v1543 = vsel %vm61, %v1501, 0
    %v1546 = vsel %vm61, %v1502, 0
    %1548 = vmatprep.subr.bf16.mxu0 0
    %1549 = vmatpush1.bf16.msra.mxu0 0
    %1550 = vmatprep.subr.bf16.mxu0 0
    %1551 = vmatpush1.bf16.msra.mxu0 0
    %1552 = vmatprep.subr.bf16.mxu0 0
    %1553 = vmatpush1.bf16.msra.mxu0 0
    %1554 = vmatprep.subr.bf16.mxu0 0
    %1555 = vmatpush1.bf16.msra.mxu0 0
    %1556 = vmatprep.subr.bf16.mxu0 0
    %1557 = vmatpush1.bf16.msra.mxu0 %v1537
    %1558 = vmatprep.subr.bf16.mxu0 0
    %1559 = vmatpush1.bf16.msra.mxu0 %v1536
    %1560 = vmatprep.subr.bf16.mxu0 0
    %1561 = vmatpush1.bf16.msra.mxu0 %v1535
    %1562 = vmatprep.subr.bf16.mxu0 0
    %1563 = vmatpush1.bf16.msra.mxu0 %v1534
    %1564 = vmatprep.subr.bf16.mxu0 0
    %1565 = vmatpush2.bf16.msra.mxu0 0
    %1566 = vmatprep.subr.bf16.mxu0 0
    %1567 = vmatpush2.bf16.msra.mxu0 0
    %1568 = vmatprep.subr.bf16.mxu0 0
    %1569 = vmatpush2.bf16.msra.mxu0 0
    %1570 = vmatprep.subr.bf16.mxu0 0
    %1571 = vmatpush2.bf16.msra.mxu0 0
    %1572 = vmatprep.subr.bf16.mxu0 0
    %1573 = vmatpush2.bf16.msra.mxu0 0
    %1574 = vmatprep.subr.bf16.mxu0 0
    %1575 = vmatpush2.bf16.msra.mxu0 0
    %1576 = vmatprep.subr.bf16.mxu0 0
    %1577 = vmatpush2.bf16.msra.mxu0 0
    %1578 = vmatprep.subr.bf16.mxu0 0
    %1579 = vmatpush2.bf16.msra.mxu0 0
    %1580 = vmatprep.mubr.bf16.mxu0 0
    %1581 = vmatmul.mubr.bf16.gmra.mxu0 %v1543
    %v1582 = vpop.f32.mrf.mxu0
    %v1583 = vadd.f32 %v1516, %v1582
    %v1584 = vpop.f32.mrf.mxu0
    %v1585 = vpop.f32.mrf.mxu0
    %v1586 = vadd.f32 %v1516, %v1585
    %v1587 = vpop.f32.mrf.mxu0
    %1588 = vmatprep.mubr.bf16.mxu0 0
    %1589 = vmatmul.mubr.bf16.gmra.mxu0 %v1546
    %v1590 = vpop.f32.mrf.mxu0
    %v1591 = vadd.f32 %v1516, %v1590
    %v1592 = vpop.f32.mrf.mxu0
    %v1593 = vpop.f32.mrf.mxu0
    %v1594 = vadd.f32 %v1516, %v1593
    %v1595 = vpop.f32.mrf.mxu0
    %1596 = vdwg.mxu0
    %v1597 = vadd.f32 %v52, %v1583
    %v1598 = vadd.f32 %v53, %v1586
    %v1599 = vadd.f32 %v54, %v1591
    %v1600 = vadd.f32 %v55, %v1594
    %v1601 = vld [vmem:[%s2] sm:$0x1]
    %v1602 = vmul.f32 %v1597, %v1597
    %v1603 = vmul.f32 %v1598, %v1598
    %v1604 = vmul.f32 %v1599, %v1599
    %v1605 = vmul.f32 %v1600, %v1600
    %v1606 = vsel %vm61, %v1602, 0.0
    %1607 = vadd.xlane.f32.xlu0 %v1606
    %v1608 = vpop.xlane.xlu0 %1607
    %v1609 = vsel %vm61, %v1603, 0.0
    %1610 = vadd.xlane.f32.xlu0 %v1609
    %v1611 = vpop.xlane.xlu0 %1610
    %v1612 = vsel %vm61, %v1604, 0.0
    %1613 = vadd.xlane.f32.xlu0 %v1612
    %v1614 = vpop.xlane.xlu0 %1613
    %v1615 = vsel %vm61, %v1605, 0.0
    %1616 = vadd.xlane.f32.xlu0 %v1615
    %v1617 = vpop.xlane.xlu0 %1616
    %v1618 = vmul.f32 %v1608, %v74
    %v1619 = vmul.f32 %v1611, %v74
    %v1620 = vmul.f32 %v1614, %v74
    %v1621 = vmul.f32 %v1617, %v74
    %v1622 = vadd.f32 %v1618, 1.1920929e-07
    %v1623 = vadd.f32 %v1619, 1.1920929e-07
    %v1624 = vadd.f32 %v1620, 1.1920929e-07
    %v1625 = vadd.f32 %v1621, 1.1920929e-07
    %v1626 = vrsqrt.pop %v1622
    %v1627 = vrsqrt.pop %v1623
    %v1628 = vrsqrt.pop %v1624
    %v1629 = vrsqrt.pop %v1625
    %v1630 = vmul.f32 %v1597, %v1626
    %v1631 = vmul.f32 %v1598, %v1627
    %v1632 = vmul.f32 %v1599, %v1628
    %v1633 = vmul.f32 %v1600, %v1629
    %v1635 = vlaneseq
    %v1636 = vshrl.u32 %v1635, 7
    %v1637 = vsub.s32 0, %v1636
    %v1638 = vrot.slane %v1601, %v1637
    %v1640 = vmul.f32 %v1630, %v1638
    %v1641 = vmul.f32 %v1631, %v1638
    %v1642 = vmul.f32 %v1632, %v1638
    %v1643 = vmul.f32 %v1633, %v1638
    %v1644 = vpack.c.bf16 %v1641, %v1640
    %v1645 = vpack.c.bf16 %v1643, %v1642
    %v1646 = vld [vmem:[%s7] sm:$0xff]
    %v1647 = vld [vmem:[%s7 + $0x8] sm:$0xff]
    %v1648 = vld [vmem:[%s7 + $0x10] sm:$0xff]
    %v1649 = vld [vmem:[%s7 + $0x18] sm:$0xff]
    %v1650 = vld [vmem:[%s7 + $0x20] sm:$0xff]
    %v1651 = vld [vmem:[%s7 + $0x28] sm:$0xff]
    %v1652 = vld [vmem:[%s7 + $0x30] sm:$0xff]
    %v1653 = vld [vmem:[%s7 + $0x38] sm:$0xff]
    %v1654 = vld [vmem:[%s7 + $0x40] sm:$0xff]
    %v1655 = vld [vmem:[%s7 + $0x48] sm:$0xff]
    %v1656 = vld [vmem:[%s7 + $0x50] sm:$0xff]
    %v1657 = vld [vmem:[%s7 + $0x58] sm:$0xff]
    %v1658 = vld [vmem:[%s7 + $0x60] sm:$0xff]
    %v1659 = vld [vmem:[%s7 + $0x68] sm:$0xff]
    %v1660 = vld [vmem:[%s7 + $0x70] sm:$0xff]
    %v1661 = vld [vmem:[%s7 + $0x78] sm:$0xff]
    %v1662 = vld [vmem:[%s8] sm:$0xf]
    %v1664 = vlaneseq
    %v1665 = vshrl.u32 %v1664, 7
    %v1666 = vsub.s32 0, %v1665
    %v1667 = vrot.slane %v1662, %v1666
    %v1668 = vlaneseq
    %v1669 = vshrl.u32 %v1668, 7
    %v1670 = vsub.s32 1, %v1669
    %v1671 = vrot.slane %v1662, %v1670
    %v1672 = vlaneseq
    %v1673 = vshrl.u32 %v1672, 7
    %v1674 = vsub.s32 2, %v1673
    %v1675 = vrot.slane %v1662, %v1674
    %v1676 = vlaneseq
    %v1677 = vshrl.u32 %v1676, 7
    %v1678 = vsub.s32 3, %v1677
    %v1679 = vrot.slane %v1662, %v1678
    %v1700 = vunpack.c.l.b16 %v1646
    %v1701 = vunpack.c.h.b16 %v1646
    %v1702 = vunpack.c.l.b16 %v1647
    %v1703 = vunpack.c.h.b16 %v1647
    %v1704 = vunpack.c.l.b16 %v1648
    %v1705 = vunpack.c.h.b16 %v1648
    %v1706 = vunpack.c.l.b16 %v1649
    %v1707 = vunpack.c.h.b16 %v1649
    %v1708 = vunpack.c.l.b16 %v1650
    %v1709 = vunpack.c.h.b16 %v1650
    %v1710 = vunpack.c.l.b16 %v1651
    %v1711 = vunpack.c.h.b16 %v1651
    %v1712 = vunpack.c.l.b16 %v1652
    %v1713 = vunpack.c.h.b16 %v1652
    %v1714 = vunpack.c.l.b16 %v1653
    %v1715 = vunpack.c.h.b16 %v1653
    %v1716 = vunpack.c.l.b16 %v1654
    %v1717 = vunpack.c.h.b16 %v1654
    %v1718 = vunpack.c.l.b16 %v1655
    %v1719 = vunpack.c.h.b16 %v1655
    %v1720 = vunpack.c.l.b16 %v1656
    %v1721 = vunpack.c.h.b16 %v1656
    %v1722 = vunpack.c.l.b16 %v1657
    %v1723 = vunpack.c.h.b16 %v1657
    %v1724 = vunpack.c.l.b16 %v1658
    %v1725 = vunpack.c.h.b16 %v1658
    %v1726 = vunpack.c.l.b16 %v1659
    %v1727 = vunpack.c.h.b16 %v1659
    %v1728 = vunpack.c.l.b16 %v1660
    %v1729 = vunpack.c.h.b16 %v1660
    %v1730 = vunpack.c.l.b16 %v1661
    %v1731 = vunpack.c.h.b16 %v1661
    %v1732 = vpack.c.b16 %v1704, %v1700
    %v1733 = vpack.c.b16 %v1705, %v1701
    %v1734 = vpack.c.b16 %v1706, %v1702
    %v1735 = vpack.c.b16 %v1707, %v1703
    %v1736 = vpack.c.b16 %v1712, %v1708
    %v1737 = vpack.c.b16 %v1713, %v1709
    %v1738 = vpack.c.b16 %v1714, %v1710
    %v1739 = vpack.c.b16 %v1715, %v1711
    %v1740 = vpack.c.b16 %v1720, %v1716
    %v1741 = vpack.c.b16 %v1721, %v1717
    %v1742 = vpack.c.b16 %v1722, %v1718
    %v1743 = vpack.c.b16 %v1723, %v1719
    %v1744 = vpack.c.b16 %v1728, %v1724
    %v1745 = vpack.c.b16 %v1729, %v1725
    %v1746 = vpack.c.b16 %v1730, %v1726
    %v1747 = vpack.c.b16 %v1731, %v1727
    %v1765 = vsel %vm61, %v1644, 0
    %v1768 = vsel %vm61, %v1645, 0
    %1770 = vmatprep.subr.bf16.mxu0 0
    %1771 = vmatpush1.bf16.msra.mxu0 0
    %1772 = vmatprep.subr.bf16.mxu0 0
    %1773 = vmatpush1.bf16.msra.mxu0 0
    %1774 = vmatprep.subr.bf16.mxu0 0
    %1775 = vmatpush1.bf16.msra.mxu0 0
    %1776 = vmatprep.subr.bf16.mxu0 0
    %1777 = vmatpush1.bf16.msra.mxu0 0
    %1778 = vmatprep.subr.bf16.mxu0 %v1745
    %1779 = vmatpush1.bf16.msra.mxu0 %v1744
    %1780 = vmatprep.subr.bf16.mxu0 %v1741
    %1781 = vmatpush1.bf16.msra.mxu0 %v1740
    %1782 = vmatprep.subr.bf16.mxu0 %v1737
    %1783 = vmatpush1.bf16.msra.mxu0 %v1736
    %1784 = vmatprep.subr.bf16.mxu0 %v1733
    %1785 = vmatpush1.bf16.msra.mxu0 %v1732
    %1786 = vmatprep.subr.bf16.mxu0 0
    %1787 = vmatpush2.bf16.msra.mxu0 0
    %1788 = vmatprep.subr.bf16.mxu0 0
    %1789 = vmatpush2.bf16.msra.mxu0 0
    %1790 = vmatprep.subr.bf16.mxu0 0
    %1791 = vmatpush2.bf16.msra.mxu0 0
    %1792 = vmatprep.subr.bf16.mxu0 0
    %1793 = vmatpush2.bf16.msra.mxu0 0
    %1794 = vmatprep.subr.bf16.mxu0 0
    %1795 = vmatpush2.bf16.msra.mxu0 0
    %1796 = vmatprep.subr.bf16.mxu0 0
    %1797 = vmatpush2.bf16.msra.mxu0 0
    %1798 = vmatprep.subr.bf16.mxu0 0
    %1799 = vmatpush2.bf16.msra.mxu0 0
    %1800 = vmatprep.subr.bf16.mxu0 0
    %1801 = vmatpush2.bf16.msra.mxu0 0
    %1802 = vmatprep.mubr.bf16.mxu0 0
    %1803 = vmatmul.mubr.bf16.gmra.mxu0 %v1765
    %v1804 = vpop.f32.mrf.mxu0
    %v1805 = vadd.f32 %v1667, %v1804
    %v1806 = vpop.f32.mrf.mxu0
    %v1807 = vadd.f32 %v1671, %v1806
    %v1808 = vpop.f32.mrf.mxu0
    %v1809 = vadd.f32 %v1667, %v1808
    %v1810 = vpop.f32.mrf.mxu0
    %v1811 = vadd.f32 %v1671, %v1810
    %1812 = vmatprep.mubr.bf16.mxu0 0
    %1813 = vmatmul.mubr.bf16.gmra.mxu0 %v1768
    %v1814 = vpop.f32.mrf.mxu0
    %v1815 = vadd.f32 %v1667, %v1814
    %v1816 = vpop.f32.mrf.mxu0
    %v1817 = vadd.f32 %v1671, %v1816
    %v1818 = vpop.f32.mrf.mxu0
    %v1819 = vadd.f32 %v1667, %v1818
    %v1820 = vpop.f32.mrf.mxu0
    %v1821 = vadd.f32 %v1671, %v1820
    %1822 = vdwg.mxu0
    %1823 = vmatprep.subr.bf16.mxu0 0
    %1824 = vmatpush1.bf16.msra.mxu0 0
    %1825 = vmatprep.subr.bf16.mxu0 0
    %1826 = vmatpush1.bf16.msra.mxu0 0
    %1827 = vmatprep.subr.bf16.mxu0 0
    %1828 = vmatpush1.bf16.msra.mxu0 0
    %1829 = vmatprep.subr.bf16.mxu0 0
    %1830 = vmatpush1.bf16.msra.mxu0 0
    %1831 = vmatprep.subr.bf16.mxu0 %v1747
    %1832 = vmatpush1.bf16.msra.mxu0 %v1746
    %1833 = vmatprep.subr.bf16.mxu0 %v1743
    %1834 = vmatpush1.bf16.msra.mxu0 %v1742
    %1835 = vmatprep.subr.bf16.mxu0 %v1739
    %1836 = vmatpush1.bf16.msra.mxu0 %v1738
    %1837 = vmatprep.subr.bf16.mxu0 %v1735
    %1838 = vmatpush1.bf16.msra.mxu0 %v1734
    %1839 = vmatprep.subr.bf16.mxu0 0
    %1840 = vmatpush2.bf16.msra.mxu0 0
    %1841 = vmatprep.subr.bf16.mxu0 0
    %1842 = vmatpush2.bf16.msra.mxu0 0
    %1843 = vmatprep.subr.bf16.mxu0 0
    %1844 = vmatpush2.bf16.msra.mxu0 0
    %1845 = vmatprep.subr.bf16.mxu0 0
    %1846 = vmatpush2.bf16.msra.mxu0 0
    %1847 = vmatprep.subr.bf16.mxu0 0
    %1848 = vmatpush2.bf16.msra.mxu0 0
    %1849 = vmatprep.subr.bf16.mxu0 0
    %1850 = vmatpush2.bf16.msra.mxu0 0
    %1851 = vmatprep.subr.bf16.mxu0 0
    %1852 = vmatpush2.bf16.msra.mxu0 0
    %1853 = vmatprep.subr.bf16.mxu0 0
    %1854 = vmatpush2.bf16.msra.mxu0 0
    %1855 = vmatprep.mubr.bf16.mxu0 0
    %1856 = vmatmul.mubr.bf16.gmra.mxu0 %v1765
    %v1857 = vpop.f32.mrf.mxu0
    %v1858 = vadd.f32 %v1675, %v1857
    %v1859 = vpop.f32.mrf.mxu0
    %v1860 = vadd.f32 %v1679, %v1859
    %v1861 = vpop.f32.mrf.mxu0
    %v1862 = vadd.f32 %v1675, %v1861
    %v1863 = vpop.f32.mrf.mxu0
    %v1864 = vadd.f32 %v1679, %v1863
    %1865 = vmatprep.mubr.bf16.mxu0 0
    %1866 = vmatmul.mubr.bf16.gmra.mxu0 %v1768
    %v1867 = vpop.f32.mrf.mxu0
    %v1868 = vadd.f32 %v1675, %v1867
    %v1869 = vpop.f32.mrf.mxu0
    %v1870 = vadd.f32 %v1679, %v1869
    %v1871 = vpop.f32.mrf.mxu0
    %v1872 = vadd.f32 %v1675, %v1871
    %v1873 = vpop.f32.mrf.mxu0
    %v1874 = vadd.f32 %v1679, %v1873
    %1875 = vdwg.mxu0
    %v1876 = vxor.u32 %v1858, 2147483648
    %v1877 = vxor.u32 %v1860, 2147483648
    %v1878 = vxor.u32 %v1862, 2147483648
    %v1879 = vxor.u32 %v1864, 2147483648
    %v1880 = vxor.u32 %v1868, 2147483648
    %v1881 = vxor.u32 %v1870, 2147483648
    %v1882 = vxor.u32 %v1872, 2147483648
    %v1883 = vxor.u32 %v1874, 2147483648
    %v1884 = vmul.f32 %v1876, 1.442695
    %v1885 = vpow.pop %v1884
    %v1886 = vmul.f32 %v1877, 1.442695
    %v1887 = vpow.pop %v1886
    %v1888 = vmul.f32 %v1878, 1.442695
    %v1889 = vpow.pop %v1888
    %v1890 = vmul.f32 %v1879, 1.442695
    %v1891 = vpow.pop %v1890
    %v1892 = vmul.f32 %v1880, 1.442695
    %v1893 = vpow.pop %v1892
    %v1894 = vmul.f32 %v1881, 1.442695
    %v1895 = vpow.pop %v1894
    %v1896 = vmul.f32 %v1882, 1.442695
    %v1897 = vpow.pop %v1896
    %v1898 = vmul.f32 %v1883, 1.442695
    %v1899 = vpow.pop %v1898
    %v1900 = vadd.f32 %v1885, 1.0
    %v1901 = vadd.f32 %v1887, 1.0
    %v1902 = vadd.f32 %v1889, 1.0
    %v1903 = vadd.f32 %v1891, 1.0
    %v1904 = vadd.f32 %v1893, 1.0
    %v1905 = vadd.f32 %v1895, 1.0
    %v1906 = vadd.f32 %v1897, 1.0
    %v1907 = vadd.f32 %v1899, 1.0
    %v1908 = vrcp.pop %v1900
    %v1909 = vmul.f32 1.0, %v1908
    %v1910 = vrcp.pop %v1901
    %v1911 = vmul.f32 1.0, %v1910
    %v1912 = vrcp.pop %v1902
    %v1913 = vmul.f32 1.0, %v1912
    %v1914 = vrcp.pop %v1903
    %v1915 = vmul.f32 1.0, %v1914
    %v1916 = vrcp.pop %v1904
    %v1917 = vmul.f32 1.0, %v1916
    %v1918 = vrcp.pop %v1905
    %v1919 = vmul.f32 1.0, %v1918
    %v1920 = vrcp.pop %v1906
    %v1921 = vmul.f32 1.0, %v1920
    %v1922 = vrcp.pop %v1907
    %v1923 = vmul.f32 1.0, %v1922
    %v1924 = vmul.f32 %v1858, %v1909
    %v1925 = vmul.f32 %v1860, %v1911
    %v1926 = vmul.f32 %v1862, %v1913
    %v1927 = vmul.f32 %v1864, %v1915
    %v1928 = vmul.f32 %v1868, %v1917
    %v1929 = vmul.f32 %v1870, %v1919
    %v1930 = vmul.f32 %v1872, %v1921
    %v1931 = vmul.f32 %v1874, %v1923
    %v1932 = vmul.f32 %v1805, %v1924
    %v1933 = vmul.f32 %v1807, %v1925
    %v1934 = vmul.f32 %v1809, %v1926
    %v1935 = vmul.f32 %v1811, %v1927
    %v1936 = vmul.f32 %v1815, %v1928
    %v1937 = vmul.f32 %v1817, %v1929
    %v1938 = vmul.f32 %v1819, %v1930
    %v1939 = vmul.f32 %v1821, %v1931
    %v1940 = vpack.c.bf16 %v1934, %v1932
    %v1941 = vpack.c.bf16 %v1935, %v1933
    %v1942 = vpack.c.bf16 %v1938, %v1936
    %v1943 = vpack.c.bf16 %v1939, %v1937
    %v1944 = vld [vmem:[%s9] sm:$0xf]
    %v1945 = vld [vmem:[%s9 + $0x4] sm:$0xf]
    %v1946 = vld [vmem:[%s9 + $0x8] sm:$0xf]
    %v1947 = vld [vmem:[%s9 + $0xc] sm:$0xf]
    %v1948 = vld [vmem:[%s9 + $0x10] sm:$0xf]
    %v1949 = vld [vmem:[%s9 + $0x14] sm:$0xf]
    %v1950 = vld [vmem:[%s9 + $0x18] sm:$0xf]
    %v1951 = vld [vmem:[%s9 + $0x1c] sm:$0xf]
    %v1952 = vld [vmem:[%s9 + $0x20] sm:$0xf]
    %v1953 = vld [vmem:[%s9 + $0x24] sm:$0xf]
    %v1954 = vld [vmem:[%s9 + $0x28] sm:$0xf]
    %v1955 = vld [vmem:[%s9 + $0x2c] sm:$0xf]
    %v1956 = vld [vmem:[%s9 + $0x30] sm:$0xf]
    %v1957 = vld [vmem:[%s9 + $0x34] sm:$0xf]
    %v1958 = vld [vmem:[%s9 + $0x38] sm:$0xf]
    %v1959 = vld [vmem:[%s9 + $0x3c] sm:$0xf]
    %v1960 = vld [vmem:[%s9 + $0x40] sm:$0xf]
    %v1961 = vld [vmem:[%s9 + $0x44] sm:$0xf]
    %v1962 = vld [vmem:[%s9 + $0x48] sm:$0xf]
    %v1963 = vld [vmem:[%s9 + $0x4c] sm:$0xf]
    %v1964 = vld [vmem:[%s9 + $0x50] sm:$0xf]
    %v1965 = vld [vmem:[%s9 + $0x54] sm:$0xf]
    %v1966 = vld [vmem:[%s9 + $0x58] sm:$0xf]
    %v1967 = vld [vmem:[%s9 + $0x5c] sm:$0xf]
    %v1968 = vld [vmem:[%s9 + $0x60] sm:$0xf]
    %v1969 = vld [vmem:[%s9 + $0x64] sm:$0xf]
    %v1970 = vld [vmem:[%s9 + $0x68] sm:$0xf]
    %v1971 = vld [vmem:[%s9 + $0x6c] sm:$0xf]
    %v1972 = vld [vmem:[%s9 + $0x70] sm:$0xf]
    %v1973 = vld [vmem:[%s9 + $0x74] sm:$0xf]
    %v1974 = vld [vmem:[%s9 + $0x78] sm:$0xf]
    %v1975 = vld [vmem:[%s9 + $0x7c] sm:$0xf]
    %v1976 = vld [vmem:[%s10] sm:$0x1]
    %v1978 = vlaneseq
    %v1979 = vshrl.u32 %v1978, 7
    %v1980 = vsub.s32 0, %v1979
    %v1981 = vrot.slane %v1976, %v1980
    %v2015 = vunpack.c.l.b16 %v1944
    %v2016 = vunpack.c.l.b16 %v1945
    %v2017 = vunpack.c.l.b16 %v1946
    %v2018 = vunpack.c.l.b16 %v1947
    %v2019 = vunpack.c.l.b16 %v1948
    %v2020 = vunpack.c.l.b16 %v1949
    %v2021 = vunpack.c.l.b16 %v1950
    %v2022 = vunpack.c.l.b16 %v1951
    %v2023 = vunpack.c.l.b16 %v1952
    %v2024 = vunpack.c.l.b16 %v1953
    %v2025 = vunpack.c.l.b16 %v1954
    %v2026 = vunpack.c.l.b16 %v1955
    %v2027 = vunpack.c.l.b16 %v1956
    %v2028 = vunpack.c.l.b16 %v1957
    %v2029 = vunpack.c.l.b16 %v1958
    %v2030 = vunpack.c.l.b16 %v1959
    %v2031 = vunpack.c.l.b16 %v1960
    %v2032 = vunpack.c.l.b16 %v1961
    %v2033 = vunpack.c.l.b16 %v1962
    %v2034 = vunpack.c.l.b16 %v1963
    %v2035 = vunpack.c.l.b16 %v1964
    %v2036 = vunpack.c.l.b16 %v1965
    %v2037 = vunpack.c.l.b16 %v1966
    %v2038 = vunpack.c.l.b16 %v1967
    %v2039 = vunpack.c.l.b16 %v1968
    %v2040 = vunpack.c.l.b16 %v1969
    %v2041 = vunpack.c.l.b16 %v1970
    %v2042 = vunpack.c.l.b16 %v1971
    %v2043 = vunpack.c.l.b16 %v1972
    %v2044 = vunpack.c.l.b16 %v1973
    %v2045 = vunpack.c.l.b16 %v1974
    %v2046 = vunpack.c.l.b16 %v1975
    %v2047 = vpack.c.b16 %v2016, %v2015
    %v2048 = vpack.c.b16 %v2018, %v2017
    %v2049 = vpack.c.b16 %v2020, %v2019
    %v2050 = vpack.c.b16 %v2022, %v2021
    %v2051 = vpack.c.b16 %v2024, %v2023
    %v2052 = vpack.c.b16 %v2026, %v2025
    %v2053 = vpack.c.b16 %v2028, %v2027
    %v2054 = vpack.c.b16 %v2030, %v2029
    %v2055 = vpack.c.b16 %v2032, %v2031
    %v2056 = vpack.c.b16 %v2034, %v2033
    %v2057 = vpack.c.b16 %v2036, %v2035
    %v2058 = vpack.c.b16 %v2038, %v2037
    %v2059 = vpack.c.b16 %v2040, %v2039
    %v2060 = vpack.c.b16 %v2042, %v2041
    %v2061 = vpack.c.b16 %v2044, %v2043
    %v2062 = vpack.c.b16 %v2046, %v2045
    %2079 = vmatprep.subr.bf16.mxu0 0
    %2080 = vmatpush1.bf16.msra.mxu0 %v2054
    %2081 = vmatprep.subr.bf16.mxu0 0
    %2082 = vmatpush1.bf16.msra.mxu0 %v2053
    %2083 = vmatprep.subr.bf16.mxu0 0
    %2084 = vmatpush1.bf16.msra.mxu0 %v2052
    %2085 = vmatprep.subr.bf16.mxu0 0
    %2086 = vmatpush1.bf16.msra.mxu0 %v2051
    %2087 = vmatprep.subr.bf16.mxu0 0
    %2088 = vmatpush1.bf16.msra.mxu0 %v2050
    %2089 = vmatprep.subr.bf16.mxu0 0
    %2090 = vmatpush1.bf16.msra.mxu0 %v2049
    %2091 = vmatprep.subr.bf16.mxu0 0
    %2092 = vmatpush1.bf16.msra.mxu0 %v2048
    %2093 = vmatprep.subr.bf16.mxu0 0
    %2094 = vmatpush1.bf16.msra.mxu0 %v2047
    %2095 = vmatprep.subr.bf16.mxu0 0
    %2096 = vmatpush2.bf16.msra.mxu0 %v2062
    %2097 = vmatprep.subr.bf16.mxu0 0
    %2098 = vmatpush2.bf16.msra.mxu0 %v2061
    %2099 = vmatprep.subr.bf16.mxu0 0
    %2100 = vmatpush2.bf16.msra.mxu0 %v2060
    %2101 = vmatprep.subr.bf16.mxu0 0
    %2102 = vmatpush2.bf16.msra.mxu0 %v2059
    %2103 = vmatprep.subr.bf16.mxu0 0
    %2104 = vmatpush2.bf16.msra.mxu0 %v2058
    %2105 = vmatprep.subr.bf16.mxu0 0
    %2106 = vmatpush2.bf16.msra.mxu0 %v2057
    %2107 = vmatprep.subr.bf16.mxu0 0
    %2108 = vmatpush2.bf16.msra.mxu0 %v2056
    %2109 = vmatprep.subr.bf16.mxu0 0
    %2110 = vmatpush2.bf16.msra.mxu0 %v2055
    %2111 = vmatprep.mubr.bf16.mxu0 %v1941
    %2112 = vmatmul.mubr.bf16.gmra.mxu0 %v1940
    %v2113 = vpop.f32.mrf.mxu0
    %v2114 = vadd.f32 %v1981, %v2113
    %v2115 = vpop.f32.mrf.mxu0
    %v2116 = vpop.f32.mrf.mxu0
    %v2117 = vadd.f32 %v1981, %v2116
    %v2118 = vpop.f32.mrf.mxu0
    %2119 = vmatprep.mubr.bf16.mxu0 %v1943
    %2120 = vmatmul.mubr.bf16.gmra.mxu0 %v1942
    %v2121 = vpop.f32.mrf.mxu0
    %v2122 = vadd.f32 %v1981, %v2121
    %v2123 = vpop.f32.mrf.mxu0
    %v2124 = vpop.f32.mrf.mxu0
    %v2125 = vadd.f32 %v1981, %v2124
    %v2126 = vpop.f32.mrf.mxu0
    %2127 = vdwg.mxu0
    %v2128 = vadd.f32 %v1597, %v2114
    %v2129 = vadd.f32 %v1598, %v2117
    %v2130 = vadd.f32 %v1599, %v2122
    %v2131 = vadd.f32 %v1600, %v2125
    %2132 = vst.msk [vmem:[#allocation2] sm:$0xff] %vm61, %v2128
    %2133 = vst.msk [vmem:[#allocation2 + $0x8] sm:$0xff] %vm61, %v2129
    %2134 = vst.msk [vmem:[#allocation2 + $0x10] sm:$0xff] %vm61, %v2130
    %2135 = vst.msk [vmem:[#allocation2 + $0x18] sm:$0xff] %vm61, %v2131
    // Predicated region
    $region62: #{tpu_custom_call.1} parent=1 // pred_check
      _
    $region63: #{tpu_custom_call.1} parent=1 // pred_check_branch
      %2137 = sbr.rel (0) target = $region65
    $region64: #{tpu_custom_call.1} parent=1 // pred_region
      %s2139 = ssub.s32 512, 512
      %2140 = vsyncadd [#allocation3], %s2139
      %s2141 = sshll.u32 [#allocation2], 4
      %s2142 = int_to_ptr.vmem [resolvable:$true] %s2141
      %2147 = dma.vmem_to_hbm [thread:$0]  %s2142, 512, %s15, [#allocation3], 128, 128, 8
    $region65: #{tpu_custom_call.1} parent=1 // pred_fallthru
      _
    // Predicated region
    $region66: #{tpu_custom_call.1} parent=1 // pred_check
      _
    $region67: #{tpu_custom_call.1} parent=1 // pred_check_branch
      %2149 = sbr.rel (0) target = $region69
    $region68: #{tpu_custom_call.1} parent=1 // pred_region
      %2150 = dma.done [#allocation3], 512
    $region69: #{tpu_custom_call.1} parent=1 // pred_fallthru
      _
    %2151 = vsyncpa [#allocation3], 1

</llo_original>
